<compile_context>
chip_gen: v6e
topology: v6e:2x2x1
jax: 0.10.0
libtpu: 0.0.40
codegen_flags: <defaults>
</compile_context>

<pallas_src>
import functools

import jax
import jax.numpy as jnp
from jax.experimental import pallas as pl
from jax.experimental.pallas import tpu as pltpu


def _lca_kernel(x_ref, wqkv_ref, bqkv_ref, epbd_ref, o_ref, *, approx_recip):
    bt, n, d = x_ref.shape
    rows = bt * n

    w = wqkv_ref[...]                                   # (d, 3d), compute dtype
    epbd = epbd_ref[...]                                # (rows, rows) block-diag exp(pb)

    # Fold batch into the M dimension (free leading-dim reshape) and run ONE
    # fused QKV projection on the MXU with f32 accumulation and f32 bias.
    x = x_ref[...].reshape(rows, d)
    qkv = jnp.dot(x.astype(w.dtype), w, preferred_element_type=jnp.float32)
    qkv = qkv + bqkv_ref[...]                           # (rows, 3d) f32

    gate = jax.nn.sigmoid(qkv[:, :d])                   # (rows, d) f32
    # NOTE: like the PyTorch reference, exp(k) itself is not max-stabilized
    # (f32 exp only overflows for k ~ 88, far outside this module's regime).
    ek = jnp.exp(qkv[:, d:2 * d])                       # (rows, d) f32
    v = qkv[:, 2 * d:]                                  # (rows, d) f32

    # num and den share the same LHS, and every batch in the tile shares the
    # same contraction -> a single (rows, rows) @ (rows, 2d) MXU matmul against
    # the block-diagonal exp(position_biases).  No transposes, no relayouts.
    rhs = jnp.concatenate([ek * v, ek], axis=-1).astype(epbd.dtype)   # (rows, 2d)
    r = jnp.dot(epbd, rhs, preferred_element_type=jnp.float32)        # (rows, 2d)

    num = r[:, :d]
    den = r[:, d:]
    if approx_recip:
        inv = pl.reciprocal(den, approx=True)           # EUP slot
        inv = inv * (2.0 - den * inv)                    # one Newton step -> ~1e-7 rel
    else:
        inv = pl.reciprocal(den, approx=False)
    out = gate * num * inv                               # (rows, d) f32

    # One dense, lane-aligned full-block store.
    o_ref[...] = out.reshape(bt, n, d).astype(o_ref.dtype)


def _default_compute_dtype():
    """bf16 MXU operands on v6e/v7x (native-rate bf16), f32 on v5e and older."""
    try:
        kind = jax.devices()[0].device_kind.lower()
    except Exception:
        return jnp.float32
    for tag in ("v6", "v7", "trillium"):
        if tag in kind:
            return jnp.bfloat16
    return jnp.float32


def _vmem_capacity_bytes():
    try:
        info = pltpu.get_tpu_info()
        cap = getattr(info, "vmem_capacity_bytes", None)
        if cap:
            return int(cap)
    except Exception:
        pass
    return 64 << 20   # conservative fallback (v7x per-TensorCore VMEM)


def _pick_batch_tile(bs, n, d, vmem_cap_bytes, target_rows=512):
    """Largest divisor of bs whose tile fits a VMEM budget; keep grid >= 2."""
    # ~16 f32 x-tile-equivalents live at once (double-buffered IO + intermediates);
    # keep that under ~60% of physical VMEM.
    tile_budget = max(1 << 20, int(0.6 * vmem_cap_bytes) // 16)
    best = 1
    for bt in range(1, bs + 1):
        if bs % bt:
            continue
        rows = bt * n
        if bt > 1 and (rows > max(target_rows, n) or rows * d * 4 > tile_budget):
            break
        best = bt
    # Keep at least 2 grid steps so both v7x TensorCores (and the pipeline)
    # have work under dimension_semantics=("parallel",).
    if bs >= 2 and best == bs:
        for bt in range(bs // 2, 0, -1):
            if bs % bt == 0:
                best = bt
                break
    return best


def _vmem_limit_bytes(x_tile_bytes, const_bytes, cap):
    need = 16 * x_tile_bytes + 2 * const_bytes + (2 << 20)
    return int(min((cap * 3) // 4, max(need, 32 << 20)))


def lca_forward(x, wq, wk, wv, bq, bk, bv, position_biases, *,
                compute_dtype=None, approx_recip=True, batch_tile=None):
    """x: (bs, n, d). wq/wk/wv are PyTorch-layout (d_out, d_in); biases (d,)."""
    bs, n, d = x.shape
    if compute_dtype is None:
        compute_dtype = _default_compute_dtype()

    vmem_cap = _vmem_capacity_bytes()
    bt = batch_tile if batch_tile is not None else _pick_batch_tile(bs, n, d, vmem_cap)
    assert bs % bt == 0, (bs, bt)
    grid = (bs // bt,)
    rows = bt * n

    # Fused, pre-transposed QKV weight (d, 3d) and fused bias (1, 3d): x @ W.T + b.
    wqkv_t = jnp.concatenate([wq.T, wk.T, wv.T], axis=1).astype(compute_dtype)
    bqkv = jnp.concatenate([bq, bk, bv]).reshape(1, 3 * d).astype(jnp.float32)

    # exp(position_biases) is batch-independent -> hoisted.  Subtracting the
    # row-max is exact for the num/den ratio and guards exp(pb) overflow.
    pb = position_biases.astype(jnp.float32)
    pb = pb - jnp.max(pb, axis=1, keepdims=True)
    epb = jnp.exp(pb)
    # Batch fusion: block-diagonal LHS -> one (rows, rows)@(rows, 2d) matmul
    # per tile, no in-kernel transposes or lane relayouts.
    epbd = jnp.kron(jnp.eye(bt, dtype=jnp.float32), epb).astype(compute_dtype)

    x_tile_bytes = rows * d * x.dtype.itemsize
    const_bytes = (wqkv_t.size * wqkv_t.dtype.itemsize
                   + bqkv.size * bqkv.dtype.itemsize
                   + epbd.size * epbd.dtype.itemsize)
    vmem_limit = _vmem_limit_bytes(x_tile_bytes, const_bytes, vmem_cap)

    kernel = functools.partial(_lca_kernel, approx_recip=approx_recip)
    out_shape = jax.ShapeDtypeStruct((bs, n, d), x.dtype)

    def call(single_buffer_consts):
        const_kw = ({"pipeline_mode": pl.Buffered(1)} if single_buffer_consts else {})
        return pl.pallas_call(
            kernel,
            out_shape=out_shape,
            grid_spec=pltpu.PrefetchScalarGridSpec(
                num_scalar_prefetch=0,
                grid=grid,
                in_specs=[
                    pl.BlockSpec((bt, n, d), lambda b: (b, 0, 0)),            # x batch tile
                    pl.BlockSpec((d, 3 * d), lambda b: (0, 0), **const_kw),   # fused Wqkv^T
                    pl.BlockSpec((1, 3 * d), lambda b: (0, 0), **const_kw),   # fused bias
                    pl.BlockSpec((rows, rows), lambda b: (0, 0), **const_kw), # block-diag exp(pb)
                ],
                out_specs=pl.BlockSpec((bt, n, d), lambda b: (b, 0, 0)),
            ),
            compiler_params=pltpu.CompilerParams(
                dimension_semantics=("parallel",),
                vmem_limit_bytes=vmem_limit,
            ),
        )(x, wqkv_t, bqkv, epbd)

    try:
        # Grid-invariant blocks don't need a second pipeline buffer.
        return jax.block_until_ready(call(True))
    except Exception:
        # Fallback if this Pallas build rejects single buffering.
        return call(False)


def lca_reference(x, wq, wk, wv, bq, bk, bv, pb):
    """Pure-JAX transcription of the PyTorch forward (for verification)."""
    bs, n, dim = x.shape
    q = x @ wq.T + bq
    k = (x @ wk.T + bk).reshape(1, bs, n, dim)
    v = (x @ wv.T + bv).reshape(1, bs, n, dim)
    pbv = pb.reshape(n, 1, n, 1)
    e = jnp.exp(k + pbv)                          # (n, bs, n, dim)
    numerator = jnp.sum(e * v, axis=2)            # (n, bs, dim)
    denominator = jnp.sum(e, axis=2)              # (n, bs, dim)
    out = numerator / denominator                 # (n, bs, dim)
    return jax.nn.sigmoid(q) * jnp.transpose(out, (1, 0, 2))


if __name__ == "__main__":
    bs, n, d_model = 4, 8, 128

    key = jax.random.PRNGKey(0)
    kx, kq, kk, kv = jax.random.split(key, 4)
    x = jax.random.normal(kx, (bs, n, d_model), dtype=jnp.float32)

    # Deterministic init matching LCA.init_weights: Linear weight ~ N(0, 0.001), bias = 0.
    wq = 0.001 * jax.random.normal(kq, (d_model, d_model), dtype=jnp.float32)
    wk = 0.001 * jax.random.normal(kk, (d_model, d_model), dtype=jnp.float32)
    wv = 0.001 * jax.random.normal(kv, (d_model, d_model), dtype=jnp.float32)
    bq = jnp.zeros((d_model,), jnp.float32)
    bk = jnp.zeros((d_model,), jnp.float32)
    bv = jnp.zeros((d_model,), jnp.float32)
    pb = jnp.ones((n, n), jnp.float32)  # position_biases init (simple=False default)

    out = lca_forward(x, wq, wk, wv, bq, bk, bv, pb)
    out = jax.block_until_ready(out)

    ref = lca_reference(x, wq, wk, wv, bq, bk, bv, pb)
    assert out.shape == (bs, n, d_model)
    # Tolerance depends on the auto-selected MXU operand dtype (f32 vs bf16).
    tol = 1e-5 if _default_compute_dtype() == jnp.float32 else 5e-3
    max_err = float(jnp.max(jnp.abs(out - ref)))
    assert jnp.allclose(out, ref, atol=tol, rtol=tol), max_err
    print("KERNEL_OK")
</pallas_src>

<mosaic_0001>
module attributes {stable_mosaic.version = 11 : i64} {
  func.func @_lca_kernel(%arg0: i32, %arg1: memref<2x8x128xf32, #tpu.memory_space<vmem>>, %arg2: memref<128x384xf32, #tpu.memory_space<vmem>>, %arg3: memref<1x384xf32, #tpu.memory_space<vmem>>, %arg4: memref<16x16xf32, #tpu.memory_space<vmem>>, %arg5: memref<2x8x128xf32, #tpu.memory_space<vmem>>) attributes {dimension_semantics = [#tpu.dimension_semantics<parallel>], iteration_bounds = array<i64: 2>, scalar_prefetch = 0 : i64, scratch_operands = 0 : i64, tpu.core_type = #tpu.core_type<tc>, window_params = [{transform_indices = @transform_0, window_bounds = array<i64: 2, 8, 128>}, {pipeline_mode = #tpu.pipeline_mode<synchronous>, transform_indices = @transform_1, window_bounds = array<i64: 128, 384>}, {pipeline_mode = #tpu.pipeline_mode<synchronous>, transform_indices = @transform_2, window_bounds = array<i64: 1, 384>}, {pipeline_mode = #tpu.pipeline_mode<synchronous>, transform_indices = @transform_3, window_bounds = array<i64: 16, 16>}, {transform_indices = @transform_4, window_bounds = array<i64: 2, 8, 128>}]} {
    %c0 = arith.constant 0 : index
    %c0_0 = arith.constant 0 : index
    %0 = vector.load %arg2[%c0, %c0_0] : memref<128x384xf32, #tpu.memory_space<vmem>>, vector<128x384xf32>
    %c0_1 = arith.constant 0 : index
    %c0_2 = arith.constant 0 : index
    %1 = vector.load %arg4[%c0_1, %c0_2] : memref<16x16xf32, #tpu.memory_space<vmem>>, vector<16x16xf32>
    %c0_3 = arith.constant 0 : index
    %c0_4 = arith.constant 0 : index
    %c0_5 = arith.constant 0 : index
    %2 = vector.load %arg1[%c0_3, %c0_4, %c0_5] : memref<2x8x128xf32, #tpu.memory_space<vmem>>, vector<2x8x128xf32>
    %3 = vector.shape_cast %2 : vector<2x8x128xf32> to vector<16x128xf32>
    %cst = arith.constant dense<0.000000e+00> : vector<16x384xf32>
    %4 = tpu.matmul %3, %0, %cst {dimension_numbers = #tpu.dot_dimension_numbers<[1], [0], [0], [1], [0, 0, 1, 1], [], []>} : vector<16x128xf32>, vector<128x384xf32>, vector<16x384xf32> -> vector<16x384xf32>
    %c0_6 = arith.constant 0 : index
    %c0_7 = arith.constant 0 : index
    %5 = vector.load %arg3[%c0_6, %c0_7] : memref<1x384xf32, #tpu.memory_space<vmem>>, vector<1x384xf32>
    %6 = vector.broadcast %5 : vector<1x384xf32> to vector<16x384xf32>
    %7 = arith.addf %4, %6 : vector<16x384xf32>
    %8 = vector.extract_strided_slice %7 {offsets = [0, 0], sizes = [16, 128], strides = [1, 1]} : vector<16x384xf32> to vector<16x128xf32>
    %9 = arith.negf %8 : vector<16x128xf32>
    %10 = math.exp %9 : vector<16x128xf32>
    %cst_8 = arith.constant 1.000000e+00 : f32
    %11 = vector.broadcast %cst_8 : f32 to vector<16x128xf32>
    %12 = arith.addf %11, %10 : vector<16x128xf32>
    %13 = arith.divf %11, %12 : vector<16x128xf32>
    %14 = vector.extract_strided_slice %7 {offsets = [0, 128], sizes = [16, 128], strides = [1, 1]} : vector<16x384xf32> to vector<16x128xf32>
    %15 = math.exp %14 : vector<16x128xf32>
    %16 = vector.extract_strided_slice %7 {offsets = [0, 256], sizes = [16, 128], strides = [1, 1]} : vector<16x384xf32> to vector<16x128xf32>
    %17 = arith.mulf %15, %16 : vector<16x128xf32>
    %18 = tpu.concatenate %17, %15 in 1 : vector<16x128xf32>, vector<16x128xf32> -> vector<16x256xf32>
    %cst_9 = arith.constant dense<0.000000e+00> : vector<16x256xf32>
    %19 = tpu.matmul %1, %18, %cst_9 {dimension_numbers = #tpu.dot_dimension_numbers<[1], [0], [0], [1], [0, 0, 1, 1], [], []>} : vector<16x16xf32>, vector<16x256xf32>, vector<16x256xf32> -> vector<16x256xf32>
    %20 = vector.extract_strided_slice %19 {offsets = [0, 0], sizes = [16, 128], strides = [1, 1]} : vector<16x256xf32> to vector<16x128xf32>
    %21 = vector.extract_strided_slice %19 {offsets = [0, 128], sizes = [16, 128], strides = [1, 1]} : vector<16x256xf32> to vector<16x128xf32>
    %22 = tpu.reciprocal %21 {approx = true} : vector<16x128xf32> -> vector<16x128xf32>
    %23 = arith.mulf %21, %22 : vector<16x128xf32>
    %cst_10 = arith.constant 2.000000e+00 : f32
    %24 = vector.broadcast %cst_10 : f32 to vector<16x128xf32>
    %25 = arith.subf %24, %23 : vector<16x128xf32>
    %26 = arith.mulf %22, %25 : vector<16x128xf32>
    %27 = arith.mulf %13, %20 : vector<16x128xf32>
    %28 = arith.mulf %27, %26 : vector<16x128xf32>
    %29 = vector.shape_cast %28 : vector<16x128xf32> to vector<2x8x128xf32>
    %c0_11 = arith.constant 0 : index
    %c0_12 = arith.constant 0 : index
    %c0_13 = arith.constant 0 : index
    %30 = vector.load %arg5[%c0_11, %c0_12, %c0_13] : memref<2x8x128xf32, #tpu.memory_space<vmem>>, vector<2x8x128xf32>
    tpu.vector_store %arg5[%c0_11, %c0_12, %c0_13], %29 {strides = array<i32>} : memref<2x8x128xf32, #tpu.memory_space<vmem>>, vector<2x8x128xf32>,
    return
  }
  func.func @transform_0(%arg0: i32) -> (i32, i32, i32) {
    %c0_i32 = arith.constant 0 : i32
    %c0_i32_0 = arith.constant 0 : i32
    %c0_i32_1 = arith.constant 0 : i32
    return %arg0, %c0_i32, %c0_i32_0 : i32, i32, i32
  }
  func.func @transform_1(%arg0: i32) -> (i32, i32) {
    %c0_i32 = arith.constant 0 : i32
    %c0_i32_0 = arith.constant 0 : i32
    %c0_i32_1 = arith.constant 0 : i32
    return %c0_i32, %c0_i32_0 : i32, i32
  }
  func.func @transform_2(%arg0: i32) -> (i32, i32) {
    %c0_i32 = arith.constant 0 : i32
    %c0_i32_0 = arith.constant 0 : i32
    %c0_i32_1 = arith.constant 0 : i32
    return %c0_i32, %c0_i32_0 : i32, i32
  }
  func.func @transform_3(%arg0: i32) -> (i32, i32) {
    %c0_i32 = arith.constant 0 : i32
    %c0_i32_0 = arith.constant 0 : i32
    %c0_i32_1 = arith.constant 0 : i32
    return %c0_i32, %c0_i32_0 : i32, i32
  }
  func.func @transform_4(%arg0: i32) -> (i32, i32, i32) {
    %c0_i32 = arith.constant 0 : i32
    %c0_i32_0 = arith.constant 0 : i32
    %c0_i32_1 = arith.constant 0 : i32
    return %arg0, %c0_i32, %c0_i32_0 : i32, i32, i32
  }
}

module attributes {stable_mosaic.version = 11 : i64} {
  func.func @_lca_kernel(%arg0: i32, %arg1: memref<2x8x128xf32, #tpu.memory_space<vmem>>, %arg2: memref<128x384xf32, #tpu.memory_space<vmem>>, %arg3: memref<1x384xf32, #tpu.memory_space<vmem>>, %arg4: memref<16x16xf32, #tpu.memory_space<vmem>>, %arg5: memref<2x8x128xf32, #tpu.memory_space<vmem>>) attributes {dimension_semantics = [#tpu.dimension_semantics<parallel>], iteration_bounds = array<i64: 2>, scalar_prefetch = 0 : i64, scratch_operands = 0 : i64, tpu.core_type = #tpu.core_type<tc>, window_params = [{transform_indices = @transform_0, window_bounds = array<i64: 2, 8, 128>}, {pipeline_mode = #tpu.pipeline_mode<synchronous>, transform_indices = @transform_1, window_bounds = array<i64: 128, 384>}, {pipeline_mode = #tpu.pipeline_mode<synchronous>, transform_indices = @transform_2, window_bounds = array<i64: 1, 384>}, {pipeline_mode = #tpu.pipeline_mode<synchronous>, transform_indices = @transform_3, window_bounds = array<i64: 16, 16>}, {transform_indices = @transform_4, window_bounds = array<i64: 2, 8, 128>}]} {
    %c0 = arith.constant 0 : index
    %c0_0 = arith.constant 0 : index
    %0 = vector.load %arg2[%c0, %c0_0] : memref<128x384xf32, #tpu.memory_space<vmem>>, vector<128x384xf32>
    %c0_1 = arith.constant 0 : index
    %c0_2 = arith.constant 0 : index
    %1 = vector.load %arg4[%c0_1, %c0_2] : memref<16x16xf32, #tpu.memory_space<vmem>>, vector<16x16xf32>
    %c0_3 = arith.constant 0 : index
    %c0_4 = arith.constant 0 : index
    %c0_5 = arith.constant 0 : index
    %2 = vector.load %arg1[%c0_3, %c0_4, %c0_5] : memref<2x8x128xf32, #tpu.memory_space<vmem>>, vector<2x8x128xf32>
    %3 = vector.shape_cast %2 : vector<2x8x128xf32> to vector<16x128xf32>
    %cst = arith.constant dense<0.000000e+00> : vector<16x384xf32>
    %4 = tpu.matmul %3, %0, %cst {dimension_numbers = #tpu.dot_dimension_numbers<[1], [0], [0], [1], [0, 0, 1, 1], [], []>} : vector<16x128xf32>, vector<128x384xf32>, vector<16x384xf32> -> vector<16x384xf32>
    %c0_6 = arith.constant 0 : index
    %c0_7 = arith.constant 0 : index
    %5 = vector.load %arg3[%c0_6, %c0_7] : memref<1x384xf32, #tpu.memory_space<vmem>>, vector<1x384xf32>
    %6 = vector.broadcast %5 : vector<1x384xf32> to vector<16x384xf32>
    %7 = arith.addf %4, %6 : vector<16x384xf32>
    %8 = vector.extract_strided_slice %7 {offsets = [0, 0], sizes = [16, 128], strides = [1, 1]} : vector<16x384xf32> to vector<16x128xf32>
    %9 = arith.negf %8 : vector<16x128xf32>
    %10 = math.exp %9 : vector<16x128xf32>
    %cst_8 = arith.constant 1.000000e+00 : f32
    %11 = vector.broadcast %cst_8 : f32 to vector<16x128xf32>
    %12 = arith.addf %11, %10 : vector<16x128xf32>
    %13 = arith.divf %11, %12 : vector<16x128xf32>
    %14 = vector.extract_strided_slice %7 {offsets = [0, 128], sizes = [16, 128], strides = [1, 1]} : vector<16x384xf32> to vector<16x128xf32>
    %15 = math.exp %14 : vector<16x128xf32>
    %16 = vector.extract_strided_slice %7 {offsets = [0, 256], sizes = [16, 128], strides = [1, 1]} : vector<16x384xf32> to vector<16x128xf32>
    %17 = arith.mulf %15, %16 : vector<16x128xf32>
    %18 = tpu.concatenate %17, %15 in 1 : vector<16x128xf32>, vector<16x128xf32> -> vector<16x256xf32>
    %cst_9 = arith.constant dense<0.000000e+00> : vector<16x256xf32>
    %19 = tpu.matmul %1, %18, %cst_9 {dimension_numbers = #tpu.dot_dimension_numbers<[1], [0], [0], [1], [0, 0, 1, 1], [], []>} : vector<16x16xf32>, vector<16x256xf32>, vector<16x256xf32> -> vector<16x256xf32>
    %20 = vector.extract_strided_slice %19 {offsets = [0, 0], sizes = [16, 128], strides = [1, 1]} : vector<16x256xf32> to vector<16x128xf32>
    %21 = vector.extract_strided_slice %19 {offsets = [0, 128], sizes = [16, 128], strides = [1, 1]} : vector<16x256xf32> to vector<16x128xf32>
    %22 = tpu.reciprocal %21 {approx = true} : vector<16x128xf32> -> vector<16x128xf32>
    %23 = arith.mulf %21, %22 : vector<16x128xf32>
    %cst_10 = arith.constant 2.000000e+00 : f32
    %24 = vector.broadcast %cst_10 : f32 to vector<16x128xf32>
    %25 = arith.subf %24, %23 : vector<16x128xf32>
    %26 = arith.mulf %22, %25 : vector<16x128xf32>
    %27 = arith.mulf %13, %20 : vector<16x128xf32>
    %28 = arith.mulf %27, %26 : vector<16x128xf32>
    %29 = vector.shape_cast %28 : vector<16x128xf32> to vector<2x8x128xf32>
    %c0_11 = arith.constant 0 : index
    %c0_12 = arith.constant 0 : index
    %c0_13 = arith.constant 0 : index
    %30 = vector.load %arg5[%c0_11, %c0_12, %c0_13] : memref<2x8x128xf32, #tpu.memory_space<vmem>>, vector<2x8x128xf32>
    tpu.vector_store %arg5[%c0_11, %c0_12, %c0_13], %29 {strides = array<i32>} : memref<2x8x128xf32, #tpu.memory_space<vmem>>, vector<2x8x128xf32>,
    return
  }
  func.func @transform_0(%arg0: i32) -> (i32, i32, i32) {
    %c0_i32 = arith.constant 0 : i32
    %c0_i32_0 = arith.constant 0 : i32
    %c0_i32_1 = arith.constant 0 : i32
    return %arg0, %c0_i32, %c0_i32_0 : i32, i32, i32
  }
  func.func @transform_1(%arg0: i32) -> (i32, i32) {
    %c0_i32 = arith.constant 0 : i32
    %c0_i32_0 = arith.constant 0 : i32
    %c0_i32_1 = arith.constant 0 : i32
    return %c0_i32, %c0_i32_0 : i32, i32
  }
  func.func @transform_2(%arg0: i32) -> (i32, i32) {
    %c0_i32 = arith.constant 0 : i32
    %c0_i32_0 = arith.constant 0 : i32
    %c0_i32_1 = arith.constant 0 : i32
    return %c0_i32, %c0_i32_0 : i32, i32
  }
  func.func @transform_3(%arg0: i32) -> (i32, i32) {
    %c0_i32 = arith.constant 0 : i32
    %c0_i32_0 = arith.constant 0 : i32
    %c0_i32_1 = arith.constant 0 : i32
    return %c0_i32, %c0_i32_0 : i32, i32
  }
  func.func @transform_4(%arg0: i32) -> (i32, i32, i32) {
    %c0_i32 = arith.constant 0 : i32
    %c0_i32_0 = arith.constant 0 : i32
    %c0_i32_1 = arith.constant 0 : i32
    return %arg0, %c0_i32, %c0_i32_0 : i32, i32, i32
  }
}

</mosaic_0001>

<llo_original>
// kernel: tpu_custom_call.1
$region0: #{tpu_custom_call.1}
  #allocation0 [shape = 'u32[]', space=smem, size = 0x4, offset = 0x4, fixed_abs, tag = 'smem constant byte address 0x4 - core index']
  #allocation1 [shape = 'u32[144,128]{1,0:T(1,128)}', space=vmem, size = 0x12000, scoped, tag = 'internal scratch']
  %s0 = inlined_call_operand.hbm [shape: f32[4,8,128], index: 0, kind: input, shape index: {}]
  %s1 = inlined_call_operand.hbm [shape: f32[128,384], index: 1, kind: input, shape index: {}]
  %s2 = inlined_call_operand.vmem [shape: f32[1,384], index: 2, kind: input, shape index: {}]
  %s3 = inlined_call_operand.hbm [shape: f32[16,16], index: 3, kind: input, shape index: {}]
  %s4 = inlined_call_operand.hbm [shape: f32[4,8,128], index: 4, kind: output, shape index: {}]
  %s5 = sld [smem:[#allocation0]]
  $region61: #{tpu_custom_call.1} parent=0
    _
  %s7 = ssub.s32 1, %s5
  %s8 = scalar_select 0, %s7, %s5
  $region1: #{tpu_custom_call.1} parent=0
    #allocation2 [shape = 'u8[16384]{0}', space=vmem, size = 0x4000, scoped, tag = 'input window, operand 0']
    #allocation3 [shape = 's32[2]{0}', space=sflag, size = 0x8, scoped, tag = 'scoped memory for tpu_custom_call.1']
    #allocation4 [shape = 's32[2]{0}', space=sflag, size = 0x8, scoped, tag = 'scoped memory for tpu_custom_call.1']
    #allocation5 [shape = 'u8[196608]{0}', space=vmem, size = 0x30000, scoped, tag = 'input window, operand 1, single buffered']
    #allocation6 [shape = 's32[1]{0}', space=sflag, size = 0x4, scoped, tag = 'scoped memory for tpu_custom_call.1']
    #allocation7 [shape = 'u8[8192]{0}', space=vmem, size = 0x2000, scoped, tag = 'input window, operand 3, single buffered']
    #allocation8 [shape = 'u8[16384]{0}', space=vmem, size = 0x4000, scoped, tag = 'output window, operand 0']
    %9 = vsyncpa [#allocation3], 0
    %s10 = scalar_lea.sflag [#allocation3], 1
    %11 = vsyncpa %s10, 0
    %12 = vsyncpa [#allocation6], 0
    %13 = vsyncpa [#allocation4], 0
    %s14 = scalar_lea.sflag [#allocation4], 1
    %15 = vsyncpa %s14, 0
    loop: start=0, step=1, limit=4
    $region2: #{tpu_custom_call.1} parent=1 // loop_pre_header
      _
    $region3: #{tpu_custom_call.1} parent=1 // loop_header
      %s17 = sphi 0, %s21
      %p18 = scmp.ge.s32.totalorder %s17, 4
      %s27 = sphi 0, %s29
      %s30 = sphi 0, %s27
      %s31 = sphi 0, %s30
      %s47 = sphi 0, %s31
      %s51 = sphi 0, %s51
      %s53 = sphi 0, %s51
      %s54 = sphi 0, %s53
      %s68 = sphi 0, %s54
      %s72 = sphi 0, %s72
      %s74 = sphi 0, %s72
      %s75 = sphi 0, %s74
      %s89 = sphi 0, %s75
      %s93 = sphi 0, %s93
      %s95 = sphi 0, %s93
      %s96 = sphi 0, %s95
      %s110 = sphi 0, %s96
      %s116 = sphi 0, %s118
      %s119 = sphi 0, %s116
      %s120 = sphi 0, %s119
      %s136 = sphi 0, %s120
    $region4: #{tpu_custom_call.1} parent=1 // loop_header_branch
      %20 = sbr.rel (%p18) target = $region8
    $region5: #{tpu_custom_call.1} parent=1 // loop_body
      %s22 = ssub.s32 %s17, 1
      %s23 = ssub.s32 %s17, 2
      %s24 = sadd.s32 %s17, 1
      %s25 = ssub.s32 %s17, %s24
      %p26 = scmp.eq.s32.totalorder %s25, 0
      %s28 = sadd.s32 %s27, 1
      %s29 = scalar_select %p26, %s27, %s28
      %p32 = pneg %p26
      %p33 = scmp.eq.s32.totalorder %s17, 1
      %p34 = por %p32, %p33
      %p35 = scmp.ne.s32.totalorder %s27, %s30
      %p36 = scmp.eq.s32.totalorder %s17, 0
      %p37 = por %p35, %p36
      %p38 = scmp.ne.s32.totalorder %s27, %s30
      %p39 = scmp.eq.s32.totalorder %s22, 1
      %p40 = por %p38, %p39
      %p41 = scmp.ne.s32.totalorder %s30, %s31
      %p42 = scmp.eq.s32.totalorder %s22, 0
      %p43 = por %p41, %p42
      %p44 = scmp.ne.s32.totalorder %s30, %s31
      %p45 = scmp.eq.s32.totalorder %s23, 1
      %p46 = por %p44, %p45
      %p48 = scmp.ne.s32.totalorder %s31, %s47
      %p49 = scmp.eq.s32.totalorder %s23, 0
      %p50 = por %p48, %p49
      %s52 = sadd.s32 %s51, 1
      %p55 = scmp.eq.s32.totalorder %s17, 1
      %p56 = scmp.ne.s32.totalorder %s51, %s53
      %p57 = scmp.eq.s32.totalorder %s17, 0
      %p58 = por %p56, %p57
      %p59 = scmp.ne.s32.totalorder %s51, %s53
      %p60 = scmp.eq.s32.totalorder %s22, 1
      %p61 = por %p59, %p60
      %p62 = scmp.ne.s32.totalorder %s53, %s54
      %p63 = scmp.eq.s32.totalorder %s22, 0
      %p64 = por %p62, %p63
      %p65 = scmp.ne.s32.totalorder %s53, %s54
      %p66 = scmp.eq.s32.totalorder %s23, 1
      %p67 = por %p65, %p66
      %p69 = scmp.ne.s32.totalorder %s54, %s68
      %p70 = scmp.eq.s32.totalorder %s23, 0
      %p71 = por %p69, %p70
      %s73 = sadd.s32 %s72, 1
      %p76 = scmp.eq.s32.totalorder %s17, 1
      %p77 = scmp.ne.s32.totalorder %s72, %s74
      %p78 = scmp.eq.s32.totalorder %s17, 0
      %p79 = por %p77, %p78
      %p80 = scmp.ne.s32.totalorder %s72, %s74
      %p81 = scmp.eq.s32.totalorder %s22, 1
      %p82 = por %p80, %p81
      %p83 = scmp.ne.s32.totalorder %s74, %s75
      %p84 = scmp.eq.s32.totalorder %s22, 0
      %p85 = por %p83, %p84
      %p86 = scmp.ne.s32.totalorder %s74, %s75
      %p87 = scmp.eq.s32.totalorder %s23, 1
      %p88 = por %p86, %p87
      %p90 = scmp.ne.s32.totalorder %s75, %s89
      %p91 = scmp.eq.s32.totalorder %s23, 0
      %p92 = por %p90, %p91
      %s94 = sadd.s32 %s93, 1
      %p97 = scmp.eq.s32.totalorder %s17, 1
      %p98 = scmp.ne.s32.totalorder %s93, %s95
      %p99 = scmp.eq.s32.totalorder %s17, 0
      %p100 = por %p98, %p99
      %p101 = scmp.ne.s32.totalorder %s93, %s95
      %p102 = scmp.eq.s32.totalorder %s22, 1
      %p103 = por %p101, %p102
      %p104 = scmp.ne.s32.totalorder %s95, %s96
      %p105 = scmp.eq.s32.totalorder %s22, 0
      %p106 = por %p104, %p105
      %p107 = scmp.ne.s32.totalorder %s95, %s96
      %p108 = scmp.eq.s32.totalorder %s23, 1
      %p109 = por %p107, %p108
      %p111 = scmp.ne.s32.totalorder %s96, %s110
      %p112 = scmp.eq.s32.totalorder %s23, 0
      %p113 = por %p111, %p112
      %s114 = ssub.s32 %s17, %s24
      %p115 = scmp.eq.s32.totalorder %s114, 0
      %s117 = sadd.s32 %s116, 1
      %s118 = scalar_select %p115, %s116, %s117
      %p121 = pneg %p115
      %p122 = scmp.eq.s32.totalorder %s17, 1
      %p123 = por %p121, %p122
      %p124 = scmp.ne.s32.totalorder %s116, %s119
      %p125 = scmp.eq.s32.totalorder %s17, 0
      %p126 = por %p124, %p125
      %p127 = scmp.ne.s32.totalorder %s116, %s119
      %p128 = scmp.eq.s32.totalorder %s22, 1
      %p129 = por %p127, %p128
      %p130 = scmp.ne.s32.totalorder %s119, %s120
      %p131 = scmp.eq.s32.totalorder %s22, 0
      %p132 = por %p130, %p131
      %p133 = scmp.ne.s32.totalorder %s119, %s120
      %p134 = scmp.eq.s32.totalorder %s23, 1
      %p135 = por %p133, %p134
      %p137 = scmp.ne.s32.totalorder %s120, %s136
      %p138 = scmp.eq.s32.totalorder %s23, 0
      %p139 = por %p137, %p138
      %p140 = scmp.le.s32.totalorder 1, %s17
      %p141 = scmp.lt.s32.totalorder %s17, 3
      %p142 = pnand %p140, %p141
      %p143 = pneg %p142
      // Predicated region
      $region9: #{tpu_custom_call.1} parent=5 // pred_check
        _
      $region10: #{tpu_custom_call.1} parent=5 // pred_check_branch
        %145 = sbr.rel (%p142) target = $region12
      $region11: #{tpu_custom_call.1} parent=5 // pred_region
        %s146 = ssub.s32 %s17, 1
        // Predicated region
        $region13: #{tpu_custom_call.1} parent=11 // pred_check
          %p147 = pneg %p64
        $region14: #{tpu_custom_call.1} parent=11 // pred_check_branch
          %149 = sbr.rel (%p147) target = $region16
        $region15: #{tpu_custom_call.1} parent=11 // pred_region
          %s151 = ssub.s32 6144, 6144
          %152 = vsyncadd [#allocation6], %s151
          %s153 = sshll.u32 [#allocation5], 4
          %s154 = int_to_ptr.vmem [resolvable:$true] %s153
          %159 = dma.hbm_to_vmem [thread:$0]  %s1, 6144, %s154, [#allocation6], 384, 384, 24
        $region16: #{tpu_custom_call.1} parent=11 // pred_fallthru
          _
        // Predicated region
        $region17: #{tpu_custom_call.1} parent=11 // pred_check
          %p160 = pneg %p85
        $region18: #{tpu_custom_call.1} parent=11 // pred_check_branch
          %162 = sbr.rel (%p160) target = $region20
        $region19: #{tpu_custom_call.1} parent=11 // pred_region
          _
        $region20: #{tpu_custom_call.1} parent=11 // pred_fallthru
          _
        // Predicated region
        $region21: #{tpu_custom_call.1} parent=11 // pred_check
          %p163 = pneg %p106
        $region22: #{tpu_custom_call.1} parent=11 // pred_check_branch
          %165 = sbr.rel (%p163) target = $region24
        $region23: #{tpu_custom_call.1} parent=11 // pred_region
          %s167 = ssub.s32 256, 256
          %168 = vsyncadd [#allocation6], %s167
          %s169 = sshll.u32 [#allocation7], 4
          %s170 = int_to_ptr.vmem [resolvable:$true] %s169
          %175 = dma.hbm_to_vmem [thread:$0]  %s3, 256, %s170, [#allocation6], 128, 128, 8
        $region24: #{tpu_custom_call.1} parent=11 // pred_fallthru
          _
      $region12: #{tpu_custom_call.1} parent=5 // pred_fallthru
        _
      %p176 = scmp.lt.s32.totalorder %s17, 2
      // Predicated region
      $region25: #{tpu_custom_call.1} parent=5 // pred_check
        %p177 = pneg %p176
      $region26: #{tpu_custom_call.1} parent=5 // pred_check_branch
        %179 = sbr.rel (%p177) target = $region28
      $region27: #{tpu_custom_call.1} parent=5 // pred_region
        // Predicated region
        $region29: #{tpu_custom_call.1} parent=27 // pred_check
          %p180 = pneg %p37
        $region30: #{tpu_custom_call.1} parent=27 // pred_check_branch
          %182 = sbr.rel (%p180) target = $region32
        $region31: #{tpu_custom_call.1} parent=27 // pred_region
          %s183 = sand.u32 %s27, 1
          %s184 = scalar_lea.sflag [#allocation3], %s183
          %s185 = sand.u32 %s27, 1
          %s186 = smul.addr %s185, 16
          %s187 = scalar_lea.vmem [#allocation2], %s186
          %s188 = smul.u32 2, %s17
          %s190 = ssub.s32 256, 256
          %191 = vsyncadd %s184, %s190
          %s192 = smul.addr %s188, 128
          %s193 = scalar_lea.hbm %s0, %s192
          %s194 = sshll.u32 %s187, 4
          %s195 = int_to_ptr.vmem [resolvable:$true] %s194
          %200 = dma.hbm_to_vmem [thread:$0]  %s193, 256, %s195, %s184, 128, 128, 8
        $region32: #{tpu_custom_call.1} parent=27 // pred_fallthru
          _
      $region28: #{tpu_custom_call.1} parent=5 // pred_fallthru
        _
      %p201 = scmp.le.s32.totalorder 1, %s17
      %p202 = scmp.lt.s32.totalorder %s17, 3
      %p203 = pnand %p201, %p202
      %p204 = pneg %p203
      // Predicated region
      $region33: #{tpu_custom_call.1} parent=5 // pred_check
        _
      $region34: #{tpu_custom_call.1} parent=5 // pred_check_branch
        %206 = sbr.rel (%p203) target = $region36
      $region35: #{tpu_custom_call.1} parent=5 // pred_region
        %s207 = ssub.s32 %s17, 1
        %s208 = sand.u32 %s30, 1
        %s209 = scalar_lea.sflag [#allocation3], %s208
        %s210 = sand.u32 %s30, 1
        %s211 = smul.addr %s210, 16
        %s212 = scalar_lea.vmem [#allocation2], %s211
        // Predicated region
        $region37: #{tpu_custom_call.1} parent=35 // pred_check
          %p213 = pneg %p43
        $region38: #{tpu_custom_call.1} parent=35 // pred_check_branch
          %215 = sbr.rel (%p213) target = $region40
        $region39: #{tpu_custom_call.1} parent=35 // pred_region
          %216 = dma.done %s209, 256
        $region40: #{tpu_custom_call.1} parent=35 // pred_fallthru
          _
        // Predicated region
        $region41: #{tpu_custom_call.1} parent=35 // pred_check
          %p217 = pneg %p64
        $region42: #{tpu_custom_call.1} parent=35 // pred_check_branch
          %219 = sbr.rel (%p217) target = $region44
        $region43: #{tpu_custom_call.1} parent=35 // pred_region
          %220 = dma.done [#allocation6], 6144
        $region44: #{tpu_custom_call.1} parent=35 // pred_fallthru
          _
        // Predicated region
        $region45: #{tpu_custom_call.1} parent=35 // pred_check
          %p221 = pneg %p106
        $region46: #{tpu_custom_call.1} parent=35 // pred_check_branch
          %223 = sbr.rel (%p221) target = $region48
        $region47: #{tpu_custom_call.1} parent=35 // pred_region
          %224 = dma.done [#allocation6], 256
        $region48: #{tpu_custom_call.1} parent=35 // pred_fallthru
          _
        %s225 = sand.u32 %s30, 1
        %s226 = scalar_lea.sflag [#allocation3], %s225
        %s227 = sand.u32 %s30, 1
        %s228 = smul.addr %s227, 16
        %s229 = scalar_lea.vmem [#allocation2], %s228
        %p230 = pneg %p43
        %p231 = pneg %p40
        %p232 = pneg %p64
        %p233 = pneg %p61
        %p234 = pneg %p85
        %p235 = pneg %p82
        %p236 = pneg %p106
        %p237 = pneg %p103
        %p238 = pneg %p132
        %p239 = pneg %p129
        %s240 = sand.u32 %s119, 1
        %s241 = scalar_lea.sflag [#allocation4], %s240
        %s242 = sand.u32 %s119, 1
        %s243 = smul.addr %s242, 16
        %s244 = scalar_lea.vmem [#allocation8], %s243
        %s245 = smul.u32 2, %s22
        %s246 = smul.u32 2, %s22
        %v247 = vld [vmem:[#allocation5] sm:$0xff]
        %v248 = vld [vmem:[#allocation5 + $0x8] sm:$0xff]
        %v249 = vld [vmem:[#allocation5 + $0x10] sm:$0xff]
        %v250 = vld [vmem:[#allocation5 + $0x18] sm:$0xff]
        %v251 = vld [vmem:[#allocation5 + $0x20] sm:$0xff]
        %v252 = vld [vmem:[#allocation5 + $0x28] sm:$0xff]
        %v253 = vld [vmem:[#allocation5 + $0x30] sm:$0xff]
        %v254 = vld [vmem:[#allocation5 + $0x38] sm:$0xff]
        %v255 = vld [vmem:[#allocation5 + $0x40] sm:$0xff]
        %v256 = vld [vmem:[#allocation5 + $0x48] sm:$0xff]
        %v257 = vld [vmem:[#allocation5 + $0x50] sm:$0xff]
        %v258 = vld [vmem:[#allocation5 + $0x58] sm:$0xff]
        %v259 = vld [vmem:[#allocation5 + $0x60] sm:$0xff]
        %v260 = vld [vmem:[#allocation5 + $0x68] sm:$0xff]
        %v261 = vld [vmem:[#allocation5 + $0x70] sm:$0xff]
        %v262 = vld [vmem:[#allocation5 + $0x78] sm:$0xff]
        %v263 = vld [vmem:[#allocation5 + $0x80] sm:$0xff]
        %v264 = vld [vmem:[#allocation5 + $0x88] sm:$0xff]
        %v265 = vld [vmem:[#allocation5 + $0x90] sm:$0xff]
        %v266 = vld [vmem:[#allocation5 + $0x98] sm:$0xff]
        %v267 = vld [vmem:[#allocation5 + $0xa0] sm:$0xff]
        %v268 = vld [vmem:[#allocation5 + $0xa8] sm:$0xff]
        %v269 = vld [vmem:[#allocation5 + $0xb0] sm:$0xff]
        %v270 = vld [vmem:[#allocation5 + $0xb8] sm:$0xff]
        %v271 = vld [vmem:[#allocation5 + $0xc0] sm:$0xff]
        %v272 = vld [vmem:[#allocation5 + $0xc8] sm:$0xff]
        %v273 = vld [vmem:[#allocation5 + $0xd0] sm:$0xff]
        %v274 = vld [vmem:[#allocation5 + $0xd8] sm:$0xff]
        %v275 = vld [vmem:[#allocation5 + $0xe0] sm:$0xff]
        %v276 = vld [vmem:[#allocation5 + $0xe8] sm:$0xff]
        %v277 = vld [vmem:[#allocation5 + $0xf0] sm:$0xff]
        %v278 = vld [vmem:[#allocation5 + $0xf8] sm:$0xff]
        %v279 = vld [vmem:[#allocation5 + $0x100] sm:$0xff]
        %v280 = vld [vmem:[#allocation5 + $0x108] sm:$0xff]
        %v281 = vld [vmem:[#allocation5 + $0x110] sm:$0xff]
        %v282 = vld [vmem:[#allocation5 + $0x118] sm:$0xff]
        %v283 = vld [vmem:[#allocation5 + $0x120] sm:$0xff]
        %v284 = vld [vmem:[#allocation5 + $0x128] sm:$0xff]
        %v285 = vld [vmem:[#allocation5 + $0x130] sm:$0xff]
        %v286 = vld [vmem:[#allocation5 + $0x138] sm:$0xff]
        %v287 = vld [vmem:[#allocation5 + $0x140] sm:$0xff]
        %v288 = vld [vmem:[#allocation5 + $0x148] sm:$0xff]
        %v289 = vld [vmem:[#allocation5 + $0x150] sm:$0xff]
        %v290 = vld [vmem:[#allocation5 + $0x158] sm:$0xff]
        %v291 = vld [vmem:[#allocation5 + $0x160] sm:$0xff]
        %v292 = vld [vmem:[#allocation5 + $0x168] sm:$0xff]
        %v293 = vld [vmem:[#allocation5 + $0x170] sm:$0xff]
        %v294 = vld [vmem:[#allocation5 + $0x178] sm:$0xff]
        %v295 = vld [vmem:[#allocation7] sm:$0xff]
        %v296 = vld [vmem:[#allocation7 + $0x8] sm:$0xff]
        %v297 = vld [vmem:[%s212] sm:$0xff]
        %v298 = vld [vmem:[%s212 + $0x8] sm:$0xff]
        %v299 = vld [vmem:[%s2] sm:$0x7]
        %v301 = vlaneseq
        %v302 = vshrl.u32 %v301, 7
        %v303 = vsub.s32 0, %v302
        %v304 = vrot.slane %v299, %v303
        %v305 = vlaneseq
        %v306 = vshrl.u32 %v305, 7
        %v307 = vsub.s32 1, %v306
        %v308 = vrot.slane %v299, %v307
        %v309 = vlaneseq
        %v310 = vshrl.u32 %v309, 7
        %v311 = vsub.s32 2, %v310
        %v312 = vrot.slane %v299, %v311
        %316 = vmatprep.subr.mxu0 %v293
        %317 = vmatpush1.msra.mxu0 %v292
        %318 = vmatprep.subr.mxu0 %v290
        %319 = vmatpush1.msra.mxu0 %v289
        %320 = vmatprep.subr.mxu0 %v287
        %321 = vmatpush1.msra.mxu0 %v286
        %322 = vmatprep.subr.mxu0 %v284
        %323 = vmatpush1.msra.mxu0 %v283
        %324 = vmatprep.subr.mxu0 %v281
        %325 = vmatpush1.msra.mxu0 %v280
        %326 = vmatprep.subr.mxu0 %v278
        %327 = vmatpush1.msra.mxu0 %v277
        %328 = vmatprep.subr.mxu0 %v275
        %329 = vmatpush1.msra.mxu0 %v274
        %330 = vmatprep.subr.mxu0 %v272
        %331 = vmatpush1.msra.mxu0 %v271
        %332 = vmatprep.subr.mxu0 %v269
        %333 = vmatpush1.msra.mxu0 %v268
        %334 = vmatprep.subr.mxu0 %v266
        %335 = vmatpush1.msra.mxu0 %v265
        %336 = vmatprep.subr.mxu0 %v263
        %337 = vmatpush1.msra.mxu0 %v262
        %338 = vmatprep.subr.mxu0 %v260
        %339 = vmatpush1.msra.mxu0 %v259
        %340 = vmatprep.subr.mxu0 %v257
        %341 = vmatpush1.msra.mxu0 %v256
        %342 = vmatprep.subr.mxu0 %v254
        %343 = vmatpush1.msra.mxu0 %v253
        %344 = vmatprep.subr.mxu0 %v251
        %345 = vmatpush1.msra.mxu0 %v250
        %346 = vmatprep.subr.mxu0 %v248
        %347 = vmatpush1.msra.mxu0 %v247
        %348 = vmatprep.subr.mxu0 0.0
        %349 = vmatpush2.msra.mxu0 0.0
        %350 = vmatprep.subr.mxu0 0.0
        %351 = vmatpush2.msra.mxu0 0.0
        %352 = vmatprep.subr.mxu0 0.0
        %353 = vmatpush2.msra.mxu0 0.0
        %354 = vmatprep.subr.mxu0 0.0
        %355 = vmatpush2.msra.mxu0 0.0
        %356 = vmatprep.subr.mxu0 0.0
        %357 = vmatpush2.msra.mxu0 0.0
        %358 = vmatprep.subr.mxu0 0.0
        %359 = vmatpush2.msra.mxu0 0.0
        %360 = vmatprep.subr.mxu0 0.0
        %361 = vmatpush2.msra.mxu0 0.0
        %362 = vmatprep.subr.mxu0 0.0
        %363 = vmatpush2.msra.mxu0 0.0
        %364 = vmatprep.subr.mxu0 0.0
        %365 = vmatpush2.msra.mxu0 0.0
        %366 = vmatprep.subr.mxu0 0.0
        %367 = vmatpush2.msra.mxu0 0.0
        %368 = vmatprep.subr.mxu0 0.0
        %369 = vmatpush2.msra.mxu0 0.0
        %370 = vmatprep.subr.mxu0 0.0
        %371 = vmatpush2.msra.mxu0 0.0
        %372 = vmatprep.subr.mxu0 0.0
        %373 = vmatpush2.msra.mxu0 0.0
        %374 = vmatprep.subr.mxu0 0.0
        %375 = vmatpush2.msra.mxu0 0.0
        %376 = vmatprep.subr.mxu0 0.0
        %377 = vmatpush2.msra.mxu0 0.0
        %378 = vmatprep.subr.mxu0 0.0
        %379 = vmatpush2.msra.mxu0 0.0
        %380 = vmatprep.mubr.f32.mxu0 0.0
        %381 = vmatmul.mubr.f32.gmra.mxu0 %v297
        %v382 = vpop.f32.mrf.mxu0
        %v383 = vadd.f32 %v304, %v382
        %v384 = vpop.f32.mrf.mxu0
        %v385 = vadd.f32 %v308, %v384
        %386 = vmatprep.mubr.f32.mxu0 0.0
        %387 = vmatmul.mubr.f32.gmra.mxu0 %v298
        %v388 = vpop.f32.mrf.mxu0
        %v389 = vadd.f32 %v304, %v388
        %v390 = vpop.f32.mrf.mxu0
        %v391 = vadd.f32 %v308, %v390
        %392 = vdwg.mxu0
        %393 = vmatprep.subr.mxu0 0.0
        %394 = vmatpush1.msra.mxu0 %v294
        %395 = vmatprep.subr.mxu0 0.0
        %396 = vmatpush1.msra.mxu0 %v291
        %397 = vmatprep.subr.mxu0 0.0
        %398 = vmatpush1.msra.mxu0 %v288
        %399 = vmatprep.subr.mxu0 0.0
        %400 = vmatpush1.msra.mxu0 %v285
        %401 = vmatprep.subr.mxu0 0.0
        %402 = vmatpush1.msra.mxu0 %v282
        %403 = vmatprep.subr.mxu0 0.0
        %404 = vmatpush1.msra.mxu0 %v279
        %405 = vmatprep.subr.mxu0 0.0
        %406 = vmatpush1.msra.mxu0 %v276
        %407 = vmatprep.subr.mxu0 0.0
        %408 = vmatpush1.msra.mxu0 %v273
        %409 = vmatprep.subr.mxu0 0.0
        %410 = vmatpush1.msra.mxu0 %v270
        %411 = vmatprep.subr.mxu0 0.0
        %412 = vmatpush1.msra.mxu0 %v267
        %413 = vmatprep.subr.mxu0 0.0
        %414 = vmatpush1.msra.mxu0 %v264
        %415 = vmatprep.subr.mxu0 0.0
        %416 = vmatpush1.msra.mxu0 %v261
        %417 = vmatprep.subr.mxu0 0.0
        %418 = vmatpush1.msra.mxu0 %v258
        %419 = vmatprep.subr.mxu0 0.0
        %420 = vmatpush1.msra.mxu0 %v255
        %421 = vmatprep.subr.mxu0 0.0
        %422 = vmatpush1.msra.mxu0 %v252
        %423 = vmatprep.subr.mxu0 0.0
        %424 = vmatpush1.msra.mxu0 %v249
        %425 = vmatprep.subr.mxu0 0.0
        %426 = vmatpush2.msra.mxu0 0.0
        %427 = vmatprep.subr.mxu0 0.0
        %428 = vmatpush2.msra.mxu0 0.0
        %429 = vmatprep.subr.mxu0 0.0
        %430 = vmatpush2.msra.mxu0 0.0
        %431 = vmatprep.subr.mxu0 0.0
        %432 = vmatpush2.msra.mxu0 0.0
        %433 = vmatprep.subr.mxu0 0.0
        %434 = vmatpush2.msra.mxu0 0.0
        %435 = vmatprep.subr.mxu0 0.0
        %436 = vmatpush2.msra.mxu0 0.0
        %437 = vmatprep.subr.mxu0 0.0
        %438 = vmatpush2.msra.mxu0 0.0
        %439 = vmatprep.subr.mxu0 0.0
        %440 = vmatpush2.msra.mxu0 0.0
        %441 = vmatprep.subr.mxu0 0.0
        %442 = vmatpush2.msra.mxu0 0.0
        %443 = vmatprep.subr.mxu0 0.0
        %444 = vmatpush2.msra.mxu0 0.0
        %445 = vmatprep.subr.mxu0 0.0
        %446 = vmatpush2.msra.mxu0 0.0
        %447 = vmatprep.subr.mxu0 0.0
        %448 = vmatpush2.msra.mxu0 0.0
        %449 = vmatprep.subr.mxu0 0.0
        %450 = vmatpush2.msra.mxu0 0.0
        %451 = vmatprep.subr.mxu0 0.0
        %452 = vmatpush2.msra.mxu0 0.0
        %453 = vmatprep.subr.mxu0 0.0
        %454 = vmatpush2.msra.mxu0 0.0
        %455 = vmatprep.subr.mxu0 0.0
        %456 = vmatpush2.msra.mxu0 0.0
        %457 = vmatprep.mubr.f32.mxu0 0.0
        %458 = vmatmul.mubr.f32.gmra.mxu0 %v297
        %v459 = vpop.f32.mrf.mxu0
        %v460 = vadd.f32 %v312, %v459
        %v461 = vpop.f32.mrf.mxu0
        %462 = vmatprep.mubr.f32.mxu0 0.0
        %463 = vmatmul.mubr.f32.gmra.mxu0 %v298
        %v464 = vpop.f32.mrf.mxu0
        %v465 = vadd.f32 %v312, %v464
        %v466 = vpop.f32.mrf.mxu0
        %467 = vdwg.mxu0
        %v468 = vxor.u32 %v383, 2147483648
        %v469 = vxor.u32 %v389, 2147483648
        %v470 = vmul.f32 %v468, 1.442695
        %v471 = vpow.pop %v470
        %v472 = vmul.f32 %v469, 1.442695
        %v473 = vpow.pop %v472
        %v474 = vadd.f32 %v471, 1.0
        %v475 = vadd.f32 %v473, 1.0
        %v476 = vrcp.pop %v474
        %v477 = vmul.f32 1.0, %v476
        %v478 = vrcp.pop %v475
        %v479 = vmul.f32 1.0, %v478
        %v480 = vmul.f32 %v385, 1.442695
        %v481 = vpow.pop %v480
        %v482 = vmul.f32 %v391, 1.442695
        %v483 = vpow.pop %v482
        %v484 = vmul.f32 %v481, %v460
        %v485 = vmul.f32 %v483, %v465
        %vm486 = vcmask 130048
        %v488 = vsel %vm486, %v295, 0
        %v491 = vsel %vm486, %v296, 0
        %493 = vmatprep.subr.mxu0 0.0
        %494 = vmatpush1.msra.mxu0 0.0
        %495 = vmatprep.subr.mxu0 0.0
        %496 = vmatpush1.msra.mxu0 0.0
        %497 = vmatprep.subr.mxu0 0.0
        %498 = vmatpush1.msra.mxu0 0.0
        %499 = vmatprep.subr.mxu0 0.0
        %500 = vmatpush1.msra.mxu0 0.0
        %501 = vmatprep.subr.mxu0 0.0
        %502 = vmatpush1.msra.mxu0 0.0
        %503 = vmatprep.subr.mxu0 0.0
        %504 = vmatpush1.msra.mxu0 0.0
        %505 = vmatprep.subr.mxu0 0.0
        %506 = vmatpush1.msra.mxu0 0.0
        %507 = vmatprep.subr.mxu0 0.0
        %508 = vmatpush1.msra.mxu0 0.0
        %509 = vmatprep.subr.mxu0 0.0
        %510 = vmatpush1.msra.mxu0 0.0
        %511 = vmatprep.subr.mxu0 0.0
        %512 = vmatpush1.msra.mxu0 0.0
        %513 = vmatprep.subr.mxu0 0.0
        %514 = vmatpush1.msra.mxu0 0.0
        %515 = vmatprep.subr.mxu0 0.0
        %516 = vmatpush1.msra.mxu0 0.0
        %517 = vmatprep.subr.mxu0 0.0
        %518 = vmatpush1.msra.mxu0 0.0
        %519 = vmatprep.subr.mxu0 0.0
        %520 = vmatpush1.msra.mxu0 0.0
        %521 = vmatprep.subr.mxu0 %v483
        %522 = vmatpush1.msra.mxu0 %v485
        %523 = vmatprep.subr.mxu0 %v481
        %524 = vmatpush1.msra.mxu0 %v484
        %525 = vmatprep.subr.mxu0 0.0
        %526 = vmatpush2.msra.mxu0 0.0
        %527 = vmatprep.subr.mxu0 0.0
        %528 = vmatpush2.msra.mxu0 0.0
        %529 = vmatprep.subr.mxu0 0.0
        %530 = vmatpush2.msra.mxu0 0.0
        %531 = vmatprep.subr.mxu0 0.0
        %532 = vmatpush2.msra.mxu0 0.0
        %533 = vmatprep.subr.mxu0 0.0
        %534 = vmatpush2.msra.mxu0 0.0
        %535 = vmatprep.subr.mxu0 0.0
        %536 = vmatpush2.msra.mxu0 0.0
        %537 = vmatprep.subr.mxu0 0.0
        %538 = vmatpush2.msra.mxu0 0.0
        %539 = vmatprep.subr.mxu0 0.0
        %540 = vmatpush2.msra.mxu0 0.0
        %541 = vmatprep.subr.mxu0 0.0
        %542 = vmatpush2.msra.mxu0 0.0
        %543 = vmatprep.subr.mxu0 0.0
        %544 = vmatpush2.msra.mxu0 0.0
        %545 = vmatprep.subr.mxu0 0.0
        %546 = vmatpush2.msra.mxu0 0.0
        %547 = vmatprep.subr.mxu0 0.0
        %548 = vmatpush2.msra.mxu0 0.0
        %549 = vmatprep.subr.mxu0 0.0
        %550 = vmatpush2.msra.mxu0 0.0
        %551 = vmatprep.subr.mxu0 0.0
        %552 = vmatpush2.msra.mxu0 0.0
        %553 = vmatprep.subr.mxu0 0.0
        %554 = vmatpush2.msra.mxu0 0.0
        %555 = vmatprep.subr.mxu0 0.0
        %556 = vmatpush2.msra.mxu0 0.0
        %557 = vmatprep.mubr.f32.mxu0 0.0
        %558 = vmatmul.mubr.f32.gmra.mxu0 %v488
        %v559 = vpop.f32.mrf.mxu0
        %v560 = vadd.f32 0.0, %v559
        %v561 = vpop.f32.mrf.mxu0
        %v562 = vadd.f32 0.0, %v561
        %563 = vmatprep.mubr.f32.mxu0 0.0
        %564 = vmatmul.mubr.f32.gmra.mxu0 %v491
        %v565 = vpop.f32.mrf.mxu0
        %v566 = vadd.f32 0.0, %v565
        %v567 = vpop.f32.mrf.mxu0
        %v568 = vadd.f32 0.0, %v567
        %569 = vdwg.mxu0
        %v570 = vrcp.pop %v562
        %v571 = vrcp.pop %v568
        %v572 = vmul.f32 %v562, %v570
        %v573 = vmul.f32 %v568, %v571
        %v574 = vsub.f32 2.0, %v572
        %v575 = vsub.f32 2.0, %v573
        %v576 = vmul.f32 %v570, %v574
        %v577 = vmul.f32 %v571, %v575
        %v578 = vmul.f32 %v477, %v560
        %v579 = vmul.f32 %v479, %v566
        %v580 = vmul.f32 %v578, %v576
        %v581 = vmul.f32 %v579, %v577
        %582 = vst [vmem:[%s244] sm:$0xff] %v580
        %583 = vst [vmem:[%s244 + $0x8] sm:$0xff] %v581
        %s584 = sand.u32 %s119, 1
        %s585 = scalar_lea.sflag [#allocation4], %s584
        %s586 = sand.u32 %s119, 1
        %s587 = smul.addr %s586, 16
        %s588 = scalar_lea.vmem [#allocation8], %s587
        // Predicated region
        $region49: #{tpu_custom_call.1} parent=35 // pred_check
          %p589 = pneg %p129
        $region50: #{tpu_custom_call.1} parent=35 // pred_check_branch
          %591 = sbr.rel (%p589) target = $region52
        $region51: #{tpu_custom_call.1} parent=35 // pred_region
          %s592 = smul.u32 2, %s22
          %s594 = ssub.s32 256, 256
          %595 = vsyncadd %s585, %s594
          %s596 = smul.addr %s592, 128
          %s597 = scalar_lea.hbm %s4, %s596
          %s598 = sshll.u32 %s588, 4
          %s599 = int_to_ptr.vmem [resolvable:$true] %s598
          %604 = dma.vmem_to_hbm [thread:$0]  %s599, 256, %s597, %s585, 128, 128, 8
        $region52: #{tpu_custom_call.1} parent=35 // pred_fallthru
          _
      $region36: #{tpu_custom_call.1} parent=5 // pred_fallthru
        _
      %p605 = scmp.le.s32.totalorder 2, %s17
      // Predicated region
      $region53: #{tpu_custom_call.1} parent=5 // pred_check
        %p606 = pneg %p605
      $region54: #{tpu_custom_call.1} parent=5 // pred_check_branch
        %608 = sbr.rel (%p606) target = $region56
      $region55: #{tpu_custom_call.1} parent=5 // pred_region
        %s609 = ssub.s32 %s17, 2
        // Predicated region
        $region57: #{tpu_custom_call.1} parent=55 // pred_check
          %p610 = pneg %p135
        $region58: #{tpu_custom_call.1} parent=55 // pred_check_branch
          %612 = sbr.rel (%p610) target = $region60
        $region59: #{tpu_custom_call.1} parent=55 // pred_region
          %s613 = sand.u32 %s120, 1
          %s614 = scalar_lea.sflag [#allocation4], %s613
          %s615 = sand.u32 %s120, 1
          %s616 = smul.addr %s615, 16
          %s617 = scalar_lea.vmem [#allocation8], %s616
          %618 = dma.done %s614, 256
        $region60: #{tpu_custom_call.1} parent=55 // pred_fallthru
          _
      $region56: #{tpu_custom_call.1} parent=5 // pred_fallthru
        _
    $region6: #{tpu_custom_call.1} parent=1 // loop_footer
      %s21 = sadd.s32 1, %s17
    $region7: #{tpu_custom_call.1} parent=1 // loop_footer_branch
      %16 = sbr.rel target = $region3
    $region8: #{tpu_custom_call.1} parent=1 // loop_exit
      _
    %619 = vsyncpa [#allocation3], 1
    %s620 = scalar_lea.sflag [#allocation3], 1
    %621 = vsyncpa %s620, 1
    %622 = vsyncpa [#allocation6], 1
    %623 = vsyncpa [#allocation4], 1
    %s624 = scalar_lea.sflag [#allocation4], 1
    %625 = vsyncpa %s624, 1

// kernel: tpu_custom_call.1
$region0: #{tpu_custom_call.1}
  #allocation0 [shape = 'u32[]', space=smem, size = 0x4, offset = 0x4, fixed_abs, tag = 'smem constant byte address 0x4 - core index']
  #allocation1 [shape = 'u32[144,128]{1,0:T(1,128)}', space=vmem, size = 0x12000, scoped, tag = 'internal scratch']
  %s0 = inlined_call_operand.hbm [shape: f32[4,8,128], index: 0, kind: input, shape index: {}]
  %s1 = inlined_call_operand.hbm [shape: f32[128,384], index: 1, kind: input, shape index: {}]
  %s2 = inlined_call_operand.vmem [shape: f32[1,384], index: 2, kind: input, shape index: {}]
  %s3 = inlined_call_operand.hbm [shape: f32[16,16], index: 3, kind: input, shape index: {}]
  %s4 = inlined_call_operand.hbm [shape: f32[4,8,128], index: 4, kind: output, shape index: {}]
  %s5 = sld [smem:[#allocation0]]
  $region61: #{tpu_custom_call.1} parent=0
    _
  %s7 = ssub.s32 1, %s5
  %s8 = scalar_select 0, %s7, %s5
  $region1: #{tpu_custom_call.1} parent=0
    #allocation2 [shape = 'u8[16384]{0}', space=vmem, size = 0x4000, scoped, tag = 'input window, operand 0']
    #allocation3 [shape = 's32[2]{0}', space=sflag, size = 0x8, scoped, tag = 'scoped memory for tpu_custom_call.1']
    #allocation4 [shape = 's32[2]{0}', space=sflag, size = 0x8, scoped, tag = 'scoped memory for tpu_custom_call.1']
    #allocation5 [shape = 'u8[196608]{0}', space=vmem, size = 0x30000, scoped, tag = 'input window, operand 1, single buffered']
    #allocation6 [shape = 's32[1]{0}', space=sflag, size = 0x4, scoped, tag = 'scoped memory for tpu_custom_call.1']
    #allocation7 [shape = 'u8[8192]{0}', space=vmem, size = 0x2000, scoped, tag = 'input window, operand 3, single buffered']
    #allocation8 [shape = 'u8[16384]{0}', space=vmem, size = 0x4000, scoped, tag = 'output window, operand 0']
    %9 = vsyncpa [#allocation3], 0
    %s10 = scalar_lea.sflag [#allocation3], 1
    %11 = vsyncpa %s10, 0
    %12 = vsyncpa [#allocation6], 0
    %13 = vsyncpa [#allocation4], 0
    %s14 = scalar_lea.sflag [#allocation4], 1
    %15 = vsyncpa %s14, 0
    loop: start=0, step=1, limit=4
    $region2: #{tpu_custom_call.1} parent=1 // loop_pre_header
      _
    $region3: #{tpu_custom_call.1} parent=1 // loop_header
      %s17 = sphi 0, %s21
      %p18 = scmp.ge.s32.totalorder %s17, 4
      %s27 = sphi 0, %s29
      %s30 = sphi 0, %s27
      %s31 = sphi 0, %s30
      %s47 = sphi 0, %s31
      %s51 = sphi 0, %s51
      %s53 = sphi 0, %s51
      %s54 = sphi 0, %s53
      %s68 = sphi 0, %s54
      %s72 = sphi 0, %s72
      %s74 = sphi 0, %s72
      %s75 = sphi 0, %s74
      %s89 = sphi 0, %s75
      %s93 = sphi 0, %s93
      %s95 = sphi 0, %s93
      %s96 = sphi 0, %s95
      %s110 = sphi 0, %s96
      %s116 = sphi 0, %s118
      %s119 = sphi 0, %s116
      %s120 = sphi 0, %s119
      %s136 = sphi 0, %s120
    $region4: #{tpu_custom_call.1} parent=1 // loop_header_branch
      %20 = sbr.rel (%p18) target = $region8
    $region5: #{tpu_custom_call.1} parent=1 // loop_body
      %s22 = ssub.s32 %s17, 1
      %s23 = ssub.s32 %s17, 2
      %s24 = sadd.s32 %s17, 1
      %s25 = ssub.s32 %s17, %s24
      %p26 = scmp.eq.s32.totalorder %s25, 0
      %s28 = sadd.s32 %s27, 1
      %s29 = scalar_select %p26, %s27, %s28
      %p32 = pneg %p26
      %p33 = scmp.eq.s32.totalorder %s17, 1
      %p34 = por %p32, %p33
      %p35 = scmp.ne.s32.totalorder %s27, %s30
      %p36 = scmp.eq.s32.totalorder %s17, 0
      %p37 = por %p35, %p36
      %p38 = scmp.ne.s32.totalorder %s27, %s30
      %p39 = scmp.eq.s32.totalorder %s22, 1
      %p40 = por %p38, %p39
      %p41 = scmp.ne.s32.totalorder %s30, %s31
      %p42 = scmp.eq.s32.totalorder %s22, 0
      %p43 = por %p41, %p42
      %p44 = scmp.ne.s32.totalorder %s30, %s31
      %p45 = scmp.eq.s32.totalorder %s23, 1
      %p46 = por %p44, %p45
      %p48 = scmp.ne.s32.totalorder %s31, %s47
      %p49 = scmp.eq.s32.totalorder %s23, 0
      %p50 = por %p48, %p49
      %s52 = sadd.s32 %s51, 1
      %p55 = scmp.eq.s32.totalorder %s17, 1
      %p56 = scmp.ne.s32.totalorder %s51, %s53
      %p57 = scmp.eq.s32.totalorder %s17, 0
      %p58 = por %p56, %p57
      %p59 = scmp.ne.s32.totalorder %s51, %s53
      %p60 = scmp.eq.s32.totalorder %s22, 1
      %p61 = por %p59, %p60
      %p62 = scmp.ne.s32.totalorder %s53, %s54
      %p63 = scmp.eq.s32.totalorder %s22, 0
      %p64 = por %p62, %p63
      %p65 = scmp.ne.s32.totalorder %s53, %s54
      %p66 = scmp.eq.s32.totalorder %s23, 1
      %p67 = por %p65, %p66
      %p69 = scmp.ne.s32.totalorder %s54, %s68
      %p70 = scmp.eq.s32.totalorder %s23, 0
      %p71 = por %p69, %p70
      %s73 = sadd.s32 %s72, 1
      %p76 = scmp.eq.s32.totalorder %s17, 1
      %p77 = scmp.ne.s32.totalorder %s72, %s74
      %p78 = scmp.eq.s32.totalorder %s17, 0
      %p79 = por %p77, %p78
      %p80 = scmp.ne.s32.totalorder %s72, %s74
      %p81 = scmp.eq.s32.totalorder %s22, 1
      %p82 = por %p80, %p81
      %p83 = scmp.ne.s32.totalorder %s74, %s75
      %p84 = scmp.eq.s32.totalorder %s22, 0
      %p85 = por %p83, %p84
      %p86 = scmp.ne.s32.totalorder %s74, %s75
      %p87 = scmp.eq.s32.totalorder %s23, 1
      %p88 = por %p86, %p87
      %p90 = scmp.ne.s32.totalorder %s75, %s89
      %p91 = scmp.eq.s32.totalorder %s23, 0
      %p92 = por %p90, %p91
      %s94 = sadd.s32 %s93, 1
      %p97 = scmp.eq.s32.totalorder %s17, 1
      %p98 = scmp.ne.s32.totalorder %s93, %s95
      %p99 = scmp.eq.s32.totalorder %s17, 0
      %p100 = por %p98, %p99
      %p101 = scmp.ne.s32.totalorder %s93, %s95
      %p102 = scmp.eq.s32.totalorder %s22, 1
      %p103 = por %p101, %p102
      %p104 = scmp.ne.s32.totalorder %s95, %s96
      %p105 = scmp.eq.s32.totalorder %s22, 0
      %p106 = por %p104, %p105
      %p107 = scmp.ne.s32.totalorder %s95, %s96
      %p108 = scmp.eq.s32.totalorder %s23, 1
      %p109 = por %p107, %p108
      %p111 = scmp.ne.s32.totalorder %s96, %s110
      %p112 = scmp.eq.s32.totalorder %s23, 0
      %p113 = por %p111, %p112
      %s114 = ssub.s32 %s17, %s24
      %p115 = scmp.eq.s32.totalorder %s114, 0
      %s117 = sadd.s32 %s116, 1
      %s118 = scalar_select %p115, %s116, %s117
      %p121 = pneg %p115
      %p122 = scmp.eq.s32.totalorder %s17, 1
      %p123 = por %p121, %p122
      %p124 = scmp.ne.s32.totalorder %s116, %s119
      %p125 = scmp.eq.s32.totalorder %s17, 0
      %p126 = por %p124, %p125
      %p127 = scmp.ne.s32.totalorder %s116, %s119
      %p128 = scmp.eq.s32.totalorder %s22, 1
      %p129 = por %p127, %p128
      %p130 = scmp.ne.s32.totalorder %s119, %s120
      %p131 = scmp.eq.s32.totalorder %s22, 0
      %p132 = por %p130, %p131
      %p133 = scmp.ne.s32.totalorder %s119, %s120
      %p134 = scmp.eq.s32.totalorder %s23, 1
      %p135 = por %p133, %p134
      %p137 = scmp.ne.s32.totalorder %s120, %s136
      %p138 = scmp.eq.s32.totalorder %s23, 0
      %p139 = por %p137, %p138
      %p140 = scmp.le.s32.totalorder 1, %s17
      %p141 = scmp.lt.s32.totalorder %s17, 3
      %p142 = pnand %p140, %p141
      %p143 = pneg %p142
      // Predicated region
      $region9: #{tpu_custom_call.1} parent=5 // pred_check
        _
      $region10: #{tpu_custom_call.1} parent=5 // pred_check_branch
        %145 = sbr.rel (%p142) target = $region12
      $region11: #{tpu_custom_call.1} parent=5 // pred_region
        %s146 = ssub.s32 %s17, 1
        // Predicated region
        $region13: #{tpu_custom_call.1} parent=11 // pred_check
          %p147 = pneg %p64
        $region14: #{tpu_custom_call.1} parent=11 // pred_check_branch
          %149 = sbr.rel (%p147) target = $region16
        $region15: #{tpu_custom_call.1} parent=11 // pred_region
          %s151 = ssub.s32 6144, 6144
          %152 = vsyncadd [#allocation6], %s151
          %s153 = sshll.u32 [#allocation5], 4
          %s154 = int_to_ptr.vmem [resolvable:$true] %s153
          %159 = dma.hbm_to_vmem [thread:$0]  %s1, 6144, %s154, [#allocation6], 384, 384, 24
        $region16: #{tpu_custom_call.1} parent=11 // pred_fallthru
          _
        // Predicated region
        $region17: #{tpu_custom_call.1} parent=11 // pred_check
          %p160 = pneg %p85
        $region18: #{tpu_custom_call.1} parent=11 // pred_check_branch
          %162 = sbr.rel (%p160) target = $region20
        $region19: #{tpu_custom_call.1} parent=11 // pred_region
          _
        $region20: #{tpu_custom_call.1} parent=11 // pred_fallthru
          _
        // Predicated region
        $region21: #{tpu_custom_call.1} parent=11 // pred_check
          %p163 = pneg %p106
        $region22: #{tpu_custom_call.1} parent=11 // pred_check_branch
          %165 = sbr.rel (%p163) target = $region24
        $region23: #{tpu_custom_call.1} parent=11 // pred_region
          %s167 = ssub.s32 256, 256
          %168 = vsyncadd [#allocation6], %s167
          %s169 = sshll.u32 [#allocation7], 4
          %s170 = int_to_ptr.vmem [resolvable:$true] %s169
          %175 = dma.hbm_to_vmem [thread:$0]  %s3, 256, %s170, [#allocation6], 128, 128, 8
        $region24: #{tpu_custom_call.1} parent=11 // pred_fallthru
          _
      $region12: #{tpu_custom_call.1} parent=5 // pred_fallthru
        _
      %p176 = scmp.lt.s32.totalorder %s17, 2
      // Predicated region
      $region25: #{tpu_custom_call.1} parent=5 // pred_check
        %p177 = pneg %p176
      $region26: #{tpu_custom_call.1} parent=5 // pred_check_branch
        %179 = sbr.rel (%p177) target = $region28
      $region27: #{tpu_custom_call.1} parent=5 // pred_region
        // Predicated region
        $region29: #{tpu_custom_call.1} parent=27 // pred_check
          %p180 = pneg %p37
        $region30: #{tpu_custom_call.1} parent=27 // pred_check_branch
          %182 = sbr.rel (%p180) target = $region32
        $region31: #{tpu_custom_call.1} parent=27 // pred_region
          %s183 = sand.u32 %s27, 1
          %s184 = scalar_lea.sflag [#allocation3], %s183
          %s185 = sand.u32 %s27, 1
          %s186 = smul.addr %s185, 16
          %s187 = scalar_lea.vmem [#allocation2], %s186
          %s188 = smul.u32 2, %s17
          %s190 = ssub.s32 256, 256
          %191 = vsyncadd %s184, %s190
          %s192 = smul.addr %s188, 128
          %s193 = scalar_lea.hbm %s0, %s192
          %s194 = sshll.u32 %s187, 4
          %s195 = int_to_ptr.vmem [resolvable:$true] %s194
          %200 = dma.hbm_to_vmem [thread:$0]  %s193, 256, %s195, %s184, 128, 128, 8
        $region32: #{tpu_custom_call.1} parent=27 // pred_fallthru
          _
      $region28: #{tpu_custom_call.1} parent=5 // pred_fallthru
        _
      %p201 = scmp.le.s32.totalorder 1, %s17
      %p202 = scmp.lt.s32.totalorder %s17, 3
      %p203 = pnand %p201, %p202
      %p204 = pneg %p203
      // Predicated region
      $region33: #{tpu_custom_call.1} parent=5 // pred_check
        _
      $region34: #{tpu_custom_call.1} parent=5 // pred_check_branch
        %206 = sbr.rel (%p203) target = $region36
      $region35: #{tpu_custom_call.1} parent=5 // pred_region
        %s207 = ssub.s32 %s17, 1
        %s208 = sand.u32 %s30, 1
        %s209 = scalar_lea.sflag [#allocation3], %s208
        %s210 = sand.u32 %s30, 1
        %s211 = smul.addr %s210, 16
        %s212 = scalar_lea.vmem [#allocation2], %s211
        // Predicated region
        $region37: #{tpu_custom_call.1} parent=35 // pred_check
          %p213 = pneg %p43
        $region38: #{tpu_custom_call.1} parent=35 // pred_check_branch
          %215 = sbr.rel (%p213) target = $region40
        $region39: #{tpu_custom_call.1} parent=35 // pred_region
          %216 = dma.done %s209, 256
        $region40: #{tpu_custom_call.1} parent=35 // pred_fallthru
          _
        // Predicated region
        $region41: #{tpu_custom_call.1} parent=35 // pred_check
          %p217 = pneg %p64
        $region42: #{tpu_custom_call.1} parent=35 // pred_check_branch
          %219 = sbr.rel (%p217) target = $region44
        $region43: #{tpu_custom_call.1} parent=35 // pred_region
          %220 = dma.done [#allocation6], 6144
        $region44: #{tpu_custom_call.1} parent=35 // pred_fallthru
          _
        // Predicated region
        $region45: #{tpu_custom_call.1} parent=35 // pred_check
          %p221 = pneg %p106
        $region46: #{tpu_custom_call.1} parent=35 // pred_check_branch
          %223 = sbr.rel (%p221) target = $region48
        $region47: #{tpu_custom_call.1} parent=35 // pred_region
          %224 = dma.done [#allocation6], 256
        $region48: #{tpu_custom_call.1} parent=35 // pred_fallthru
          _
        %s225 = sand.u32 %s30, 1
        %s226 = scalar_lea.sflag [#allocation3], %s225
        %s227 = sand.u32 %s30, 1
        %s228 = smul.addr %s227, 16
        %s229 = scalar_lea.vmem [#allocation2], %s228
        %p230 = pneg %p43
        %p231 = pneg %p40
        %p232 = pneg %p64
        %p233 = pneg %p61
        %p234 = pneg %p85
        %p235 = pneg %p82
        %p236 = pneg %p106
        %p237 = pneg %p103
        %p238 = pneg %p132
        %p239 = pneg %p129
        %s240 = sand.u32 %s119, 1
        %s241 = scalar_lea.sflag [#allocation4], %s240
        %s242 = sand.u32 %s119, 1
        %s243 = smul.addr %s242, 16
        %s244 = scalar_lea.vmem [#allocation8], %s243
        %s245 = smul.u32 2, %s22
        %s246 = smul.u32 2, %s22
        %v247 = vld [vmem:[#allocation5] sm:$0xff]
        %v248 = vld [vmem:[#allocation5 + $0x8] sm:$0xff]
        %v249 = vld [vmem:[#allocation5 + $0x10] sm:$0xff]
        %v250 = vld [vmem:[#allocation5 + $0x18] sm:$0xff]
        %v251 = vld [vmem:[#allocation5 + $0x20] sm:$0xff]
        %v252 = vld [vmem:[#allocation5 + $0x28] sm:$0xff]
        %v253 = vld [vmem:[#allocation5 + $0x30] sm:$0xff]
        %v254 = vld [vmem:[#allocation5 + $0x38] sm:$0xff]
        %v255 = vld [vmem:[#allocation5 + $0x40] sm:$0xff]
        %v256 = vld [vmem:[#allocation5 + $0x48] sm:$0xff]
        %v257 = vld [vmem:[#allocation5 + $0x50] sm:$0xff]
        %v258 = vld [vmem:[#allocation5 + $0x58] sm:$0xff]
        %v259 = vld [vmem:[#allocation5 + $0x60] sm:$0xff]
        %v260 = vld [vmem:[#allocation5 + $0x68] sm:$0xff]
        %v261 = vld [vmem:[#allocation5 + $0x70] sm:$0xff]
        %v262 = vld [vmem:[#allocation5 + $0x78] sm:$0xff]
        %v263 = vld [vmem:[#allocation5 + $0x80] sm:$0xff]
        %v264 = vld [vmem:[#allocation5 + $0x88] sm:$0xff]
        %v265 = vld [vmem:[#allocation5 + $0x90] sm:$0xff]
        %v266 = vld [vmem:[#allocation5 + $0x98] sm:$0xff]
        %v267 = vld [vmem:[#allocation5 + $0xa0] sm:$0xff]
        %v268 = vld [vmem:[#allocation5 + $0xa8] sm:$0xff]
        %v269 = vld [vmem:[#allocation5 + $0xb0] sm:$0xff]
        %v270 = vld [vmem:[#allocation5 + $0xb8] sm:$0xff]
        %v271 = vld [vmem:[#allocation5 + $0xc0] sm:$0xff]
        %v272 = vld [vmem:[#allocation5 + $0xc8] sm:$0xff]
        %v273 = vld [vmem:[#allocation5 + $0xd0] sm:$0xff]
        %v274 = vld [vmem:[#allocation5 + $0xd8] sm:$0xff]
        %v275 = vld [vmem:[#allocation5 + $0xe0] sm:$0xff]
        %v276 = vld [vmem:[#allocation5 + $0xe8] sm:$0xff]
        %v277 = vld [vmem:[#allocation5 + $0xf0] sm:$0xff]
        %v278 = vld [vmem:[#allocation5 + $0xf8] sm:$0xff]
        %v279 = vld [vmem:[#allocation5 + $0x100] sm:$0xff]
        %v280 = vld [vmem:[#allocation5 + $0x108] sm:$0xff]
        %v281 = vld [vmem:[#allocation5 + $0x110] sm:$0xff]
        %v282 = vld [vmem:[#allocation5 + $0x118] sm:$0xff]
        %v283 = vld [vmem:[#allocation5 + $0x120] sm:$0xff]
        %v284 = vld [vmem:[#allocation5 + $0x128] sm:$0xff]
        %v285 = vld [vmem:[#allocation5 + $0x130] sm:$0xff]
        %v286 = vld [vmem:[#allocation5 + $0x138] sm:$0xff]
        %v287 = vld [vmem:[#allocation5 + $0x140] sm:$0xff]
        %v288 = vld [vmem:[#allocation5 + $0x148] sm:$0xff]
        %v289 = vld [vmem:[#allocation5 + $0x150] sm:$0xff]
        %v290 = vld [vmem:[#allocation5 + $0x158] sm:$0xff]
        %v291 = vld [vmem:[#allocation5 + $0x160] sm:$0xff]
        %v292 = vld [vmem:[#allocation5 + $0x168] sm:$0xff]
        %v293 = vld [vmem:[#allocation5 + $0x170] sm:$0xff]
        %v294 = vld [vmem:[#allocation5 + $0x178] sm:$0xff]
        %v295 = vld [vmem:[#allocation7] sm:$0xff]
        %v296 = vld [vmem:[#allocation7 + $0x8] sm:$0xff]
        %v297 = vld [vmem:[%s212] sm:$0xff]
        %v298 = vld [vmem:[%s212 + $0x8] sm:$0xff]
        %v299 = vld [vmem:[%s2] sm:$0x7]
        %v301 = vlaneseq
        %v302 = vshrl.u32 %v301, 7
        %v303 = vsub.s32 0, %v302
        %v304 = vrot.slane %v299, %v303
        %v305 = vlaneseq
        %v306 = vshrl.u32 %v305, 7
        %v307 = vsub.s32 1, %v306
        %v308 = vrot.slane %v299, %v307
        %v309 = vlaneseq
        %v310 = vshrl.u32 %v309, 7
        %v311 = vsub.s32 2, %v310
        %v312 = vrot.slane %v299, %v311
        %316 = vmatprep.subr.mxu0 %v293
        %317 = vmatpush1.msra.mxu0 %v292
        %318 = vmatprep.subr.mxu0 %v290
        %319 = vmatpush1.msra.mxu0 %v289
        %320 = vmatprep.subr.mxu0 %v287
        %321 = vmatpush1.msra.mxu0 %v286
        %322 = vmatprep.subr.mxu0 %v284
        %323 = vmatpush1.msra.mxu0 %v283
        %324 = vmatprep.subr.mxu0 %v281
        %325 = vmatpush1.msra.mxu0 %v280
        %326 = vmatprep.subr.mxu0 %v278
        %327 = vmatpush1.msra.mxu0 %v277
        %328 = vmatprep.subr.mxu0 %v275
        %329 = vmatpush1.msra.mxu0 %v274
        %330 = vmatprep.subr.mxu0 %v272
        %331 = vmatpush1.msra.mxu0 %v271
        %332 = vmatprep.subr.mxu0 %v269
        %333 = vmatpush1.msra.mxu0 %v268
        %334 = vmatprep.subr.mxu0 %v266
        %335 = vmatpush1.msra.mxu0 %v265
        %336 = vmatprep.subr.mxu0 %v263
        %337 = vmatpush1.msra.mxu0 %v262
        %338 = vmatprep.subr.mxu0 %v260
        %339 = vmatpush1.msra.mxu0 %v259
        %340 = vmatprep.subr.mxu0 %v257
        %341 = vmatpush1.msra.mxu0 %v256
        %342 = vmatprep.subr.mxu0 %v254
        %343 = vmatpush1.msra.mxu0 %v253
        %344 = vmatprep.subr.mxu0 %v251
        %345 = vmatpush1.msra.mxu0 %v250
        %346 = vmatprep.subr.mxu0 %v248
        %347 = vmatpush1.msra.mxu0 %v247
        %348 = vmatprep.subr.mxu0 0.0
        %349 = vmatpush2.msra.mxu0 0.0
        %350 = vmatprep.subr.mxu0 0.0
        %351 = vmatpush2.msra.mxu0 0.0
        %352 = vmatprep.subr.mxu0 0.0
        %353 = vmatpush2.msra.mxu0 0.0
        %354 = vmatprep.subr.mxu0 0.0
        %355 = vmatpush2.msra.mxu0 0.0
        %356 = vmatprep.subr.mxu0 0.0
        %357 = vmatpush2.msra.mxu0 0.0
        %358 = vmatprep.subr.mxu0 0.0
        %359 = vmatpush2.msra.mxu0 0.0
        %360 = vmatprep.subr.mxu0 0.0
        %361 = vmatpush2.msra.mxu0 0.0
        %362 = vmatprep.subr.mxu0 0.0
        %363 = vmatpush2.msra.mxu0 0.0
        %364 = vmatprep.subr.mxu0 0.0
        %365 = vmatpush2.msra.mxu0 0.0
        %366 = vmatprep.subr.mxu0 0.0
        %367 = vmatpush2.msra.mxu0 0.0
        %368 = vmatprep.subr.mxu0 0.0
        %369 = vmatpush2.msra.mxu0 0.0
        %370 = vmatprep.subr.mxu0 0.0
        %371 = vmatpush2.msra.mxu0 0.0
        %372 = vmatprep.subr.mxu0 0.0
        %373 = vmatpush2.msra.mxu0 0.0
        %374 = vmatprep.subr.mxu0 0.0
        %375 = vmatpush2.msra.mxu0 0.0
        %376 = vmatprep.subr.mxu0 0.0
        %377 = vmatpush2.msra.mxu0 0.0
        %378 = vmatprep.subr.mxu0 0.0
        %379 = vmatpush2.msra.mxu0 0.0
        %380 = vmatprep.mubr.f32.mxu0 0.0
        %381 = vmatmul.mubr.f32.gmra.mxu0 %v297
        %v382 = vpop.f32.mrf.mxu0
        %v383 = vadd.f32 %v304, %v382
        %v384 = vpop.f32.mrf.mxu0
        %v385 = vadd.f32 %v308, %v384
        %386 = vmatprep.mubr.f32.mxu0 0.0
        %387 = vmatmul.mubr.f32.gmra.mxu0 %v298
        %v388 = vpop.f32.mrf.mxu0
        %v389 = vadd.f32 %v304, %v388
        %v390 = vpop.f32.mrf.mxu0
        %v391 = vadd.f32 %v308, %v390
        %392 = vdwg.mxu0
        %393 = vmatprep.subr.mxu0 0.0
        %394 = vmatpush1.msra.mxu0 %v294
        %395 = vmatprep.subr.mxu0 0.0
        %396 = vmatpush1.msra.mxu0 %v291
        %397 = vmatprep.subr.mxu0 0.0
        %398 = vmatpush1.msra.mxu0 %v288
        %399 = vmatprep.subr.mxu0 0.0
        %400 = vmatpush1.msra.mxu0 %v285
        %401 = vmatprep.subr.mxu0 0.0
        %402 = vmatpush1.msra.mxu0 %v282
        %403 = vmatprep.subr.mxu0 0.0
        %404 = vmatpush1.msra.mxu0 %v279
        %405 = vmatprep.subr.mxu0 0.0
        %406 = vmatpush1.msra.mxu0 %v276
        %407 = vmatprep.subr.mxu0 0.0
        %408 = vmatpush1.msra.mxu0 %v273
        %409 = vmatprep.subr.mxu0 0.0
        %410 = vmatpush1.msra.mxu0 %v270
        %411 = vmatprep.subr.mxu0 0.0
        %412 = vmatpush1.msra.mxu0 %v267
        %413 = vmatprep.subr.mxu0 0.0
        %414 = vmatpush1.msra.mxu0 %v264
        %415 = vmatprep.subr.mxu0 0.0
        %416 = vmatpush1.msra.mxu0 %v261
        %417 = vmatprep.subr.mxu0 0.0
        %418 = vmatpush1.msra.mxu0 %v258
        %419 = vmatprep.subr.mxu0 0.0
        %420 = vmatpush1.msra.mxu0 %v255
        %421 = vmatprep.subr.mxu0 0.0
        %422 = vmatpush1.msra.mxu0 %v252
        %423 = vmatprep.subr.mxu0 0.0
        %424 = vmatpush1.msra.mxu0 %v249
        %425 = vmatprep.subr.mxu0 0.0
        %426 = vmatpush2.msra.mxu0 0.0
        %427 = vmatprep.subr.mxu0 0.0
        %428 = vmatpush2.msra.mxu0 0.0
        %429 = vmatprep.subr.mxu0 0.0
        %430 = vmatpush2.msra.mxu0 0.0
        %431 = vmatprep.subr.mxu0 0.0
        %432 = vmatpush2.msra.mxu0 0.0
        %433 = vmatprep.subr.mxu0 0.0
        %434 = vmatpush2.msra.mxu0 0.0
        %435 = vmatprep.subr.mxu0 0.0
        %436 = vmatpush2.msra.mxu0 0.0
        %437 = vmatprep.subr.mxu0 0.0
        %438 = vmatpush2.msra.mxu0 0.0
        %439 = vmatprep.subr.mxu0 0.0
        %440 = vmatpush2.msra.mxu0 0.0
        %441 = vmatprep.subr.mxu0 0.0
        %442 = vmatpush2.msra.mxu0 0.0
        %443 = vmatprep.subr.mxu0 0.0
        %444 = vmatpush2.msra.mxu0 0.0
        %445 = vmatprep.subr.mxu0 0.0
        %446 = vmatpush2.msra.mxu0 0.0
        %447 = vmatprep.subr.mxu0 0.0
        %448 = vmatpush2.msra.mxu0 0.0
        %449 = vmatprep.subr.mxu0 0.0
        %450 = vmatpush2.msra.mxu0 0.0
        %451 = vmatprep.subr.mxu0 0.0
        %452 = vmatpush2.msra.mxu0 0.0
        %453 = vmatprep.subr.mxu0 0.0
        %454 = vmatpush2.msra.mxu0 0.0
        %455 = vmatprep.subr.mxu0 0.0
        %456 = vmatpush2.msra.mxu0 0.0
        %457 = vmatprep.mubr.f32.mxu0 0.0
        %458 = vmatmul.mubr.f32.gmra.mxu0 %v297
        %v459 = vpop.f32.mrf.mxu0
        %v460 = vadd.f32 %v312, %v459
        %v461 = vpop.f32.mrf.mxu0
        %462 = vmatprep.mubr.f32.mxu0 0.0
        %463 = vmatmul.mubr.f32.gmra.mxu0 %v298
        %v464 = vpop.f32.mrf.mxu0
        %v465 = vadd.f32 %v312, %v464
        %v466 = vpop.f32.mrf.mxu0
        %467 = vdwg.mxu0
        %v468 = vxor.u32 %v383, 2147483648
        %v469 = vxor.u32 %v389, 2147483648
        %v470 = vmul.f32 %v468, 1.442695
        %v471 = vpow.pop %v470
        %v472 = vmul.f32 %v469, 1.442695
        %v473 = vpow.pop %v472
        %v474 = vadd.f32 %v471, 1.0
        %v475 = vadd.f32 %v473, 1.0
        %v476 = vrcp.pop %v474
        %v477 = vmul.f32 1.0, %v476
        %v478 = vrcp.pop %v475
        %v479 = vmul.f32 1.0, %v478
        %v480 = vmul.f32 %v385, 1.442695
        %v481 = vpow.pop %v480
        %v482 = vmul.f32 %v391, 1.442695
        %v483 = vpow.pop %v482
        %v484 = vmul.f32 %v481, %v460
        %v485 = vmul.f32 %v483, %v465
        %vm486 = vcmask 130048
        %v488 = vsel %vm486, %v295, 0
        %v491 = vsel %vm486, %v296, 0
        %493 = vmatprep.subr.mxu0 0.0
        %494 = vmatpush1.msra.mxu0 0.0
        %495 = vmatprep.subr.mxu0 0.0
        %496 = vmatpush1.msra.mxu0 0.0
        %497 = vmatprep.subr.mxu0 0.0
        %498 = vmatpush1.msra.mxu0 0.0
        %499 = vmatprep.subr.mxu0 0.0
        %500 = vmatpush1.msra.mxu0 0.0
        %501 = vmatprep.subr.mxu0 0.0
        %502 = vmatpush1.msra.mxu0 0.0
        %503 = vmatprep.subr.mxu0 0.0
        %504 = vmatpush1.msra.mxu0 0.0
        %505 = vmatprep.subr.mxu0 0.0
        %506 = vmatpush1.msra.mxu0 0.0
        %507 = vmatprep.subr.mxu0 0.0
        %508 = vmatpush1.msra.mxu0 0.0
        %509 = vmatprep.subr.mxu0 0.0
        %510 = vmatpush1.msra.mxu0 0.0
        %511 = vmatprep.subr.mxu0 0.0
        %512 = vmatpush1.msra.mxu0 0.0
        %513 = vmatprep.subr.mxu0 0.0
        %514 = vmatpush1.msra.mxu0 0.0
        %515 = vmatprep.subr.mxu0 0.0
        %516 = vmatpush1.msra.mxu0 0.0
        %517 = vmatprep.subr.mxu0 0.0
        %518 = vmatpush1.msra.mxu0 0.0
        %519 = vmatprep.subr.mxu0 0.0
        %520 = vmatpush1.msra.mxu0 0.0
        %521 = vmatprep.subr.mxu0 %v483
        %522 = vmatpush1.msra.mxu0 %v485
        %523 = vmatprep.subr.mxu0 %v481
        %524 = vmatpush1.msra.mxu0 %v484
        %525 = vmatprep.subr.mxu0 0.0
        %526 = vmatpush2.msra.mxu0 0.0
        %527 = vmatprep.subr.mxu0 0.0
        %528 = vmatpush2.msra.mxu0 0.0
        %529 = vmatprep.subr.mxu0 0.0
        %530 = vmatpush2.msra.mxu0 0.0
        %531 = vmatprep.subr.mxu0 0.0
        %532 = vmatpush2.msra.mxu0 0.0
        %533 = vmatprep.subr.mxu0 0.0
        %534 = vmatpush2.msra.mxu0 0.0
        %535 = vmatprep.subr.mxu0 0.0
        %536 = vmatpush2.msra.mxu0 0.0
        %537 = vmatprep.subr.mxu0 0.0
        %538 = vmatpush2.msra.mxu0 0.0
        %539 = vmatprep.subr.mxu0 0.0
        %540 = vmatpush2.msra.mxu0 0.0
        %541 = vmatprep.subr.mxu0 0.0
        %542 = vmatpush2.msra.mxu0 0.0
        %543 = vmatprep.subr.mxu0 0.0
        %544 = vmatpush2.msra.mxu0 0.0
        %545 = vmatprep.subr.mxu0 0.0
        %546 = vmatpush2.msra.mxu0 0.0
        %547 = vmatprep.subr.mxu0 0.0
        %548 = vmatpush2.msra.mxu0 0.0
        %549 = vmatprep.subr.mxu0 0.0
        %550 = vmatpush2.msra.mxu0 0.0
        %551 = vmatprep.subr.mxu0 0.0
        %552 = vmatpush2.msra.mxu0 0.0
        %553 = vmatprep.subr.mxu0 0.0
        %554 = vmatpush2.msra.mxu0 0.0
        %555 = vmatprep.subr.mxu0 0.0
        %556 = vmatpush2.msra.mxu0 0.0
        %557 = vmatprep.mubr.f32.mxu0 0.0
        %558 = vmatmul.mubr.f32.gmra.mxu0 %v488
        %v559 = vpop.f32.mrf.mxu0
        %v560 = vadd.f32 0.0, %v559
        %v561 = vpop.f32.mrf.mxu0
        %v562 = vadd.f32 0.0, %v561
        %563 = vmatprep.mubr.f32.mxu0 0.0
        %564 = vmatmul.mubr.f32.gmra.mxu0 %v491
        %v565 = vpop.f32.mrf.mxu0
        %v566 = vadd.f32 0.0, %v565
        %v567 = vpop.f32.mrf.mxu0
        %v568 = vadd.f32 0.0, %v567
        %569 = vdwg.mxu0
        %v570 = vrcp.pop %v562
        %v571 = vrcp.pop %v568
        %v572 = vmul.f32 %v562, %v570
        %v573 = vmul.f32 %v568, %v571
        %v574 = vsub.f32 2.0, %v572
        %v575 = vsub.f32 2.0, %v573
        %v576 = vmul.f32 %v570, %v574
        %v577 = vmul.f32 %v571, %v575
        %v578 = vmul.f32 %v477, %v560
        %v579 = vmul.f32 %v479, %v566
        %v580 = vmul.f32 %v578, %v576
        %v581 = vmul.f32 %v579, %v577
        %582 = vst [vmem:[%s244] sm:$0xff] %v580
        %583 = vst [vmem:[%s244 + $0x8] sm:$0xff] %v581
        %s584 = sand.u32 %s119, 1
        %s585 = scalar_lea.sflag [#allocation4], %s584
        %s586 = sand.u32 %s119, 1
        %s587 = smul.addr %s586, 16
        %s588 = scalar_lea.vmem [#allocation8], %s587
        // Predicated region
        $region49: #{tpu_custom_call.1} parent=35 // pred_check
          %p589 = pneg %p129
        $region50: #{tpu_custom_call.1} parent=35 // pred_check_branch
          %591 = sbr.rel (%p589) target = $region52
        $region51: #{tpu_custom_call.1} parent=35 // pred_region
          %s592 = smul.u32 2, %s22
          %s594 = ssub.s32 256, 256
          %595 = vsyncadd %s585, %s594
          %s596 = smul.addr %s592, 128
          %s597 = scalar_lea.hbm %s4, %s596
          %s598 = sshll.u32 %s588, 4
          %s599 = int_to_ptr.vmem [resolvable:$true] %s598
          %604 = dma.vmem_to_hbm [thread:$0]  %s599, 256, %s597, %s585, 128, 128, 8
        $region52: #{tpu_custom_call.1} parent=35 // pred_fallthru
          _
      $region36: #{tpu_custom_call.1} parent=5 // pred_fallthru
        _
      %p605 = scmp.le.s32.totalorder 2, %s17
      // Predicated region
      $region53: #{tpu_custom_call.1} parent=5 // pred_check
        %p606 = pneg %p605
      $region54: #{tpu_custom_call.1} parent=5 // pred_check_branch
        %608 = sbr.rel (%p606) target = $region56
      $region55: #{tpu_custom_call.1} parent=5 // pred_region
        %s609 = ssub.s32 %s17, 2
        // Predicated region
        $region57: #{tpu_custom_call.1} parent=55 // pred_check
          %p610 = pneg %p135
        $region58: #{tpu_custom_call.1} parent=55 // pred_check_branch
          %612 = sbr.rel (%p610) target = $region60
        $region59: #{tpu_custom_call.1} parent=55 // pred_region
          %s613 = sand.u32 %s120, 1
          %s614 = scalar_lea.sflag [#allocation4], %s613
          %s615 = sand.u32 %s120, 1
          %s616 = smul.addr %s615, 16
          %s617 = scalar_lea.vmem [#allocation8], %s616
          %618 = dma.done %s614, 256
        $region60: #{tpu_custom_call.1} parent=55 // pred_fallthru
          _
      $region56: #{tpu_custom_call.1} parent=5 // pred_fallthru
        _
    $region6: #{tpu_custom_call.1} parent=1 // loop_footer
      %s21 = sadd.s32 1, %s17
    $region7: #{tpu_custom_call.1} parent=1 // loop_footer_branch
      %16 = sbr.rel target = $region3
    $region8: #{tpu_custom_call.1} parent=1 // loop_exit
      _
    %619 = vsyncpa [#allocation3], 1
    %s620 = scalar_lea.sflag [#allocation3], 1
    %621 = vsyncpa %s620, 1
    %622 = vsyncpa [#allocation6], 1
    %623 = vsyncpa [#allocation4], 1
    %s624 = scalar_lea.sflag [#allocation4], 1
    %625 = vsyncpa %s624, 1

</llo_original>
